<compile_context>
chip_gen: v7x
topology: tpu7x:2x2x1
jax: 0.10.0
libtpu: 0.0.40
codegen_flags: <defaults>
</compile_context>

<pallas_src>
import math
import functools

import jax
import jax.numpy as jnp
from jax.experimental import pallas as pl
from jax.experimental.pallas import tpu as pltpu


def se_kernel(start_ref, ft_src_ref, ft_dst_ref, idxt_ref,
              w1t_ref, b1t_ref, w2t_ref, b2t_ref, out_ref, acc_ref):
    """One (i, j) grid step: i = TM destination points (lanes), j = step in the per-tile
    source-block window [start[i], start[i] + grid_j)."""
    i = pl.program_id(0)
    j = pl.program_id(1)

    @pl.when(j == 0)
    def _init():
        acc_ref[...] = jnp.zeros_like(acc_ref)

    tn = ft_src_ref.shape[1]
    tm = out_ref.shape[1]
    k = idxt_ref.shape[0]

    # Tile-relative neighbor indices for the source block actually loaded this step.
    src_block = start_ref[i] + j
    local_idx = idxt_ref[...] - src_block * tn                        # (K, TM) int32
    in_range = (local_idx >= 0) & (local_idx < tn)                    # (K, TM) bool
    # Empty-tile skip: if no neighbor of this destination tile lives in this source block,
    # the one-hot would be all zeros -> skipping the build + matmul is exact.
    hit = jnp.any(in_range)

    @pl.when(hit)
    def _accum():
        # One-hot neighbor-count block: onehot[s, r] = #{k : idx[r, k] == src_block*TN + s}.
        # K lane-dense compares on the VPU, accumulated in f32 (exact, works on v5e too),
        # then a single cast to bf16 for a one-pass MXU matmul.  Duplicate neighbors are
        # double-counted, matching F[idx].mean(1) exactly.
        src_ids = jax.lax.broadcasted_iota(jnp.int32, (tn, tm), 0)    # (TN, TM)
        onehot = (src_ids == local_idx[0][None, :]).astype(jnp.float32)
        for kk in range(1, k):
            onehot = onehot + (src_ids == local_idx[kk][None, :]).astype(jnp.float32)
        # (C, TN) bf16 @ (TN, TM) bf16 -> f32 accumulate: neighbor feature sum (transposed).
        acc_ref[...] += jnp.dot(ft_src_ref[...], onehot.astype(jnp.bfloat16),
                                preferred_element_type=jnp.float32)

    # Finalize once per destination tile: tiny MLP + sigmoid gate + elementwise gating.
    @pl.when(j == pl.num_programs(1) - 1)
    def _finalize():
        sum_t = acc_ref[...]                                          # (C, TM); 1/K is in W1
        hid = jnp.dot(w1t_ref[...], sum_t,
                      preferred_element_type=jnp.float32) + b1t_ref[...]      # (H, TM)
        hid = jnp.maximum(hid, 0.0)
        logits = jnp.dot(w2t_ref[...], hid,
                         preferred_element_type=jnp.float32) + b2t_ref[...]   # (C, TM)
        gate = jax.nn.sigmoid(logits)                                 # exp on the EUP
        out_ref[...] = (ft_dst_ref[...] * gate).astype(out_ref.dtype)


@functools.partial(jax.jit, static_argnames=("n", "tm", "tn", "grid_j"))
def _se_forward_impl(F, idx_p, start, W1, b1, W2, b2, *, n, tm, tn, grid_j):
    n_pad, k = idx_p.shape
    c = F.shape[1]
    h = W1.shape[1]
    grid_i = n_pad // tm

    # Channels-first (lane-dense) layout + weight transposes: layout plumbing done by XLA
    # outside the kernel.  Source copy is bf16 (one-pass MXU, half the repeated DMA); the
    # destination copy used for the final gating stays f32 so x.F enters the product exactly.
    ft_dst = jnp.zeros((c, n_pad), jnp.float32).at[:, :n].set(F.T.astype(jnp.float32))
    ft_src = ft_dst.astype(jnp.bfloat16)
    idx_t = idx_p.T.astype(jnp.int32)                        # (K, n_pad)
    w1t = (W1.astype(jnp.float32) * (1.0 / k)).T             # (H, C)  -- 1/K folded in
    b1t = b1.astype(jnp.float32).reshape(h, 1)               # (H, 1)
    w2t = W2.astype(jnp.float32).T                           # (C, H)
    b2t = b2.astype(jnp.float32).reshape(c, 1)               # (C, 1)

    grid_spec = pltpu.PrefetchScalarGridSpec(
        num_scalar_prefetch=1,                               # start: per-tile first src block
        grid=(grid_i, grid_j),
        in_specs=[
            pl.BlockSpec((c, tn), lambda i, j, start: (0, start[i] + j)),  # F^T src window
            pl.BlockSpec((c, tm), lambda i, j, start: (0, i)),             # F^T dst tile
            pl.BlockSpec((k, tm), lambda i, j, start: (0, i)),             # idx^T tile
            pl.BlockSpec((h, c), lambda i, j, start: (0, 0)),              # W1^T / K
            pl.BlockSpec((h, 1), lambda i, j, start: (0, 0)),              # b1^T
            pl.BlockSpec((c, h), lambda i, j, start: (0, 0)),              # W2^T
            pl.BlockSpec((c, 1), lambda i, j, start: (0, 0)),              # b2^T
        ],
        out_specs=pl.BlockSpec((c, tm), lambda i, j, start: (0, i)),
        scratch_shapes=[pltpu.VMEM((c, tm), jnp.float32)],   # neighbor-sum accumulator
    )

    out_t = pl.pallas_call(
        se_kernel,
        out_shape=jax.ShapeDtypeStruct((c, n_pad), jnp.float32),
        grid_spec=grid_spec,
        compiler_params=pltpu.CompilerParams(
            dimension_semantics=("parallel", "arbitrary")),
    )(start, ft_src, ft_dst, idx_t, w1t, b1t, w2t, b2t)

    return out_t[:, :n].T


def se_forward(F, idx, W1, b1, W2, b2, *, tm=256, tn=128):
    """out = F * Sigmoid(Linear(ReLU(Linear(F[idx].mean(1)))))  -- SE.forward (idx given).

    Host-side wrapper: computes the per-destination-tile source-block window (data-dependent,
    so the window length becomes a static grid extent) and calls the jitted Pallas impl.
    """
    n, c = F.shape
    k = idx.shape[1]

    # Pad the point axis to a multiple of both tile sizes.
    step = math.lcm(tm, tn)
    n_pad = step * ((n + step - 1) // step)
    grid_i = n_pad // tm
    nblocks = n_pad // tn

    idx = jnp.asarray(idx, jnp.int32)
    if n_pad > n:
        # Replicate the last real row's idx into padded rows: keeps per-tile block ranges
        # tight; the spurious counts land only on padded dst columns (zero features, sliced).
        idx_p = jnp.concatenate(
            [idx, jnp.broadcast_to(idx[n - 1:n], (n_pad - n, k))], axis=0)
    else:
        idx_p = idx

    # Per-destination-tile source-block range [lo, hi]; grid_j = max window length.
    blocks = (idx_p // tn).reshape(grid_i, tm, k)
    lo = blocks.min(axis=(1, 2))
    hi = blocks.max(axis=(1, 2))
    grid_j = int(jnp.max(hi - lo + 1))            # static (host sync; recompiles if it grows)
    # Clamp the window start so start + grid_j - 1 never exceeds the last block (surplus
    # steps then read real blocks and are skipped by the in-kernel `hit` predicate).
    start = jnp.minimum(lo, nblocks - grid_j).astype(jnp.int32)

    return _se_forward_impl(F, idx_p, start, W1, b1, W2, b2,
                            n=n, tm=tm, tn=tn, grid_j=grid_j)


def knn_jax(pos, k):
    # Glue replacement for pointops_cuda.knnquery_cuda (single batch / single offset):
    # brute-force squared distances, k nearest (includes the point itself).
    # TODO(synk): the offset-based multi-batch kNN of pointops has no clean Pallas equivalent here.
    d2 = jnp.sum((pos[:, None, :] - pos[None, :, :]) ** 2, axis=-1)
    order = jnp.argsort(d2, axis=1)
    return order[:, :k].astype(jnp.int32)


def init_linear(key, fan_in, fan_out):
    # Deterministic nn.Linear-style init: U(-1/sqrt(fan_in), 1/sqrt(fan_in))
    kw, kb = jax.random.split(key)
    bound = 1.0 / jnp.sqrt(float(fan_in))
    W = jax.random.uniform(kw, (fan_in, fan_out), jnp.float32, -bound, bound)
    b = jax.random.uniform(kb, (1, fan_out), jnp.float32, -bound, bound)
    return W, b


if __name__ == "__main__":
    # Module-consistent shapes: N points, C channels (inc), K neighbors, reduction=4.
    # N=1000 with tm=256 exercises padding (n_pad=1024), a (4, grid_j) grid (grid_i >= 2 for
    # v7x's two TensorCores), and the block-sparse source window.
    N, C, K, reduction = 1000, 16, 8, 4
    hidden = C // reduction

    key = jax.random.PRNGKey(0)
    k_coord, k_feat, k_l1, k_l2 = jax.random.split(key, 4)

    # Sparse-tensor stand-in: integer voxel coords (x.C[:, :3]) and features x.F.
    coords = jax.random.randint(k_coord, (N, 3), 0, 32).astype(jnp.float32)
    # Spatial (voxel-lexicographic) sort so kNN indices are block-local -> the per-tile
    # source-block windows exploited by the kernel stay narrow.
    vox_key = coords[:, 0] * (32 * 32) + coords[:, 1] * 32 + coords[:, 2]
    coords = coords[jnp.argsort(vox_key)]

    F = jax.random.normal(k_feat, (N, C), jnp.float32)
    W1, b1 = init_linear(k_l1, C, hidden)
    W2, b2 = init_linear(k_l2, hidden, C)

    idx = knn_jax(coords, K)                      # (N, K) int32, idx=None path of forward()

    out = se_forward(F, idx, W1, b1, W2, b2)
    out = jax.block_until_ready(out)

    # Pure-JAX reference (exact PyTorch semantics) for a sanity check.  The kernel rounds
    # the *source* features to bf16 for the adjacency matmul (review-approved), so allow a
    # slightly looser tolerance than pure f32.
    avg_ref = F[idx].mean(axis=1)
    hid_ref = jnp.maximum(avg_ref @ W1 + b1, 0.0)
    gate_ref = jax.nn.sigmoid(hid_ref @ W2 + b2)
    expected = F * gate_ref
    assert out.shape == expected.shape
    max_err = float(jnp.max(jnp.abs(out - expected)))
    assert jnp.allclose(out, expected, atol=5e-3, rtol=5e-3), (
        "mismatch vs reference, max abs err = " + str(max_err))

    print("KERNEL_OK")
</pallas_src>

<mosaic_0001>
module attributes {stable_mosaic.version = 11 : i64} {
  func.func @se_kernel(%arg0: i32, %arg1: i32, %arg2: memref<4xi32, #tpu.memory_space<smem>>, %arg3: memref<16x128xbf16, #tpu.memory_space<vmem>>, %arg4: memref<16x256xf32, #tpu.memory_space<vmem>>, %arg5: memref<8x256xi32, #tpu.memory_space<vmem>>, %arg6: memref<4x16xf32, #tpu.memory_space<vmem>>, %arg7: memref<4x1xf32, #tpu.memory_space<vmem>>, %arg8: memref<16x4xf32, #tpu.memory_space<vmem>>, %arg9: memref<16x1xf32, #tpu.memory_space<vmem>>, %arg10: memref<16x256xf32, #tpu.memory_space<vmem>>, %arg11: memref<16x256xf32, #tpu.memory_space<vmem>>) attributes {dimension_semantics = [#tpu.dimension_semantics<parallel>, #tpu.dimension_semantics<arbitrary>], iteration_bounds = array<i64: 4, 6>, scalar_prefetch = 1 : i64, scratch_operands = 1 : i64, tpu.core_type = #tpu.core_type<tc>, window_params = [{transform_indices = @transform_0, window_bounds = array<i64: 16, 128>}, {transform_indices = @transform_1, window_bounds = array<i64: 16, 256>}, {transform_indices = @transform_2, window_bounds = array<i64: 8, 256>}, {pipeline_mode = #tpu.pipeline_mode<synchronous>, transform_indices = @transform_3, window_bounds = array<i64: 4, 16>}, {pipeline_mode = #tpu.pipeline_mode<synchronous>, transform_indices = @transform_4, window_bounds = array<i64: 4, 1>}, {pipeline_mode = #tpu.pipeline_mode<synchronous>, transform_indices = @transform_5, window_bounds = array<i64: 16, 4>}, {pipeline_mode = #tpu.pipeline_mode<synchronous>, transform_indices = @transform_6, window_bounds = array<i64: 16, 1>}, {transform_indices = @transform_7, window_bounds = array<i64: 16, 256>}]} {
    %c0_i32 = arith.constant 0 : i32
    %0 = arith.cmpi eq, %arg1, %c0_i32 : i32
    %1 = arith.extui %0 : i1 to i32
    %c0_i32_0 = arith.constant 0 : i32
    %2 = arith.cmpi ne, %1, %c0_i32_0 : i32
    scf.if %2 {
      %cst_9 = arith.constant 0.000000e+00 : f32
      %28 = vector.broadcast %cst_9 : f32 to vector<16x256xf32>
      %c0_10 = arith.constant 0 : index
      %c0_11 = arith.constant 0 : index
      %29 = vector.load %arg11[%c0_10, %c0_11] : memref<16x256xf32, #tpu.memory_space<vmem>>, vector<16x256xf32>
      tpu.vector_store %arg11[%c0_10, %c0_11], %28 {strides = array<i32>} : memref<16x256xf32, #tpu.memory_space<vmem>>, vector<16x256xf32>,
    } else {
    }
    %3 = arith.index_cast %arg0 : i32 to index
    %4 = memref.load %arg2[%3] : memref<4xi32, #tpu.memory_space<smem>>
    %5 = arith.addi %4, %arg1 : i32
    %c0 = arith.constant 0 : index
    %c0_1 = arith.constant 0 : index
    %6 = vector.load %arg5[%c0, %c0_1] : memref<8x256xi32, #tpu.memory_space<vmem>>, vector<8x256xi32>
    %c128_i32 = arith.constant 128 : i32
    %7 = arith.muli %5, %c128_i32 : i32
    %8 = vector.broadcast %7 : i32 to vector<8x256xi32>
    %9 = arith.subi %6, %8 : vector<8x256xi32>
    %c0_i32_2 = arith.constant 0 : i32
    %10 = vector.broadcast %c0_i32_2 : i32 to vector<8x256xi32>
    %11 = arith.cmpi sge, %9, %10 : vector<8x256xi32>
    %c128_i32_3 = arith.constant 128 : i32
    %12 = vector.broadcast %c128_i32_3 : i32 to vector<8x256xi32>
    %13 = arith.cmpi slt, %9, %12 : vector<8x256xi32>
    %14 = arith.andi %11, %13 : vector<8x256xi1>
    %cst = arith.constant 1.000000e+00 : f32
    %cst_4 = arith.constant 0.000000e+00 : f32
    %15 = vector.broadcast %cst : f32 to vector<8x256xf32>
    %16 = vector.broadcast %cst_4 : f32 to vector<8x256xf32>
    %17 = arith.select %14, %15, %16 : vector<8x256xi1>, vector<8x256xf32>
    %18 = vector.shape_cast %17 : vector<8x256xf32> to vector<1x8x256xf32>
    %cst_5 = arith.constant dense<0xFF800000> : vector<1xf32>
    %19 = vector.multi_reduction <maximumf>, %18, %cst_5 [1, 2] : vector<1x8x256xf32> to vector<1xf32>
    %20 = vector.shape_cast %19 : vector<1xf32> to vector<1x1x1xf32>
    %21 = vector.extract %20[0, 0, 0] : f32 from vector<1x1x1xf32>
    %cst_6 = arith.constant 0.000000e+00 : f32
    %22 = arith.cmpf ogt, %21, %cst_6 : f32
    %23 = arith.extui %22 : i1 to i32
    %c0_i32_7 = arith.constant 0 : i32
    %24 = arith.cmpi ne, %23, %c0_i32_7 : i32
    scf.if %24 {
      %28 = tpu.iota {dimensions = array<i32: 0>} : vector<128x256xi32>
      %29 = vector.extract_strided_slice %9 {offsets = [0, 0], sizes = [1, 256], strides = [1, 1]} : vector<8x256xi32> to vector<1x256xi32>
      %30 = vector.shape_cast %29 : vector<1x256xi32> to vector<256xi32>
      %31 = vector.shape_cast %30 : vector<256xi32> to vector<1x256xi32>
      %32 = vector.broadcast %31 : vector<1x256xi32> to vector<128x256xi32>
      %33 = arith.cmpi eq, %28, %32 : vector<128x256xi32>
      %34 = arith.extui %33 : vector<128x256xi1> to vector<128x256xi32>
      %35 = arith.sitofp %34 : vector<128x256xi32> to vector<128x256xf32>
      %36 = vector.extract_strided_slice %9 {offsets = [1, 0], sizes = [1, 256], strides = [1, 1]} : vector<8x256xi32> to vector<1x256xi32>
      %37 = vector.shape_cast %36 : vector<1x256xi32> to vector<256xi32>
      %38 = vector.shape_cast %37 : vector<256xi32> to vector<1x256xi32>
      %39 = vector.broadcast %38 : vector<1x256xi32> to vector<128x256xi32>
      %40 = arith.cmpi eq, %28, %39 : vector<128x256xi32>
      %41 = arith.extui %40 : vector<128x256xi1> to vector<128x256xi32>
      %42 = arith.sitofp %41 : vector<128x256xi32> to vector<128x256xf32>
      %43 = arith.addf %35, %42 : vector<128x256xf32>
      %44 = vector.extract_strided_slice %9 {offsets = [2, 0], sizes = [1, 256], strides = [1, 1]} : vector<8x256xi32> to vector<1x256xi32>
      %45 = vector.shape_cast %44 : vector<1x256xi32> to vector<256xi32>
      %46 = vector.shape_cast %45 : vector<256xi32> to vector<1x256xi32>
      %47 = vector.broadcast %46 : vector<1x256xi32> to vector<128x256xi32>
      %48 = arith.cmpi eq, %28, %47 : vector<128x256xi32>
      %49 = arith.extui %48 : vector<128x256xi1> to vector<128x256xi32>
      %50 = arith.sitofp %49 : vector<128x256xi32> to vector<128x256xf32>
      %51 = arith.addf %43, %50 : vector<128x256xf32>
      %52 = vector.extract_strided_slice %9 {offsets = [3, 0], sizes = [1, 256], strides = [1, 1]} : vector<8x256xi32> to vector<1x256xi32>
      %53 = vector.shape_cast %52 : vector<1x256xi32> to vector<256xi32>
      %54 = vector.shape_cast %53 : vector<256xi32> to vector<1x256xi32>
      %55 = vector.broadcast %54 : vector<1x256xi32> to vector<128x256xi32>
      %56 = arith.cmpi eq, %28, %55 : vector<128x256xi32>
      %57 = arith.extui %56 : vector<128x256xi1> to vector<128x256xi32>
      %58 = arith.sitofp %57 : vector<128x256xi32> to vector<128x256xf32>
      %59 = arith.addf %51, %58 : vector<128x256xf32>
      %60 = vector.extract_strided_slice %9 {offsets = [4, 0], sizes = [1, 256], strides = [1, 1]} : vector<8x256xi32> to vector<1x256xi32>
      %61 = vector.shape_cast %60 : vector<1x256xi32> to vector<256xi32>
      %62 = vector.shape_cast %61 : vector<256xi32> to vector<1x256xi32>
      %63 = vector.broadcast %62 : vector<1x256xi32> to vector<128x256xi32>
      %64 = arith.cmpi eq, %28, %63 : vector<128x256xi32>
      %65 = arith.extui %64 : vector<128x256xi1> to vector<128x256xi32>
      %66 = arith.sitofp %65 : vector<128x256xi32> to vector<128x256xf32>
      %67 = arith.addf %59, %66 : vector<128x256xf32>
      %68 = vector.extract_strided_slice %9 {offsets = [5, 0], sizes = [1, 256], strides = [1, 1]} : vector<8x256xi32> to vector<1x256xi32>
      %69 = vector.shape_cast %68 : vector<1x256xi32> to vector<256xi32>
      %70 = vector.shape_cast %69 : vector<256xi32> to vector<1x256xi32>
      %71 = vector.broadcast %70 : vector<1x256xi32> to vector<128x256xi32>
      %72 = arith.cmpi eq, %28, %71 : vector<128x256xi32>
      %73 = arith.extui %72 : vector<128x256xi1> to vector<128x256xi32>
      %74 = arith.sitofp %73 : vector<128x256xi32> to vector<128x256xf32>
      %75 = arith.addf %67, %74 : vector<128x256xf32>
      %76 = vector.extract_strided_slice %9 {offsets = [6, 0], sizes = [1, 256], strides = [1, 1]} : vector<8x256xi32> to vector<1x256xi32>
      %77 = vector.shape_cast %76 : vector<1x256xi32> to vector<256xi32>
      %78 = vector.shape_cast %77 : vector<256xi32> to vector<1x256xi32>
      %79 = vector.broadcast %78 : vector<1x256xi32> to vector<128x256xi32>
      %80 = arith.cmpi eq, %28, %79 : vector<128x256xi32>
      %81 = arith.extui %80 : vector<128x256xi1> to vector<128x256xi32>
      %82 = arith.sitofp %81 : vector<128x256xi32> to vector<128x256xf32>
      %83 = arith.addf %75, %82 : vector<128x256xf32>
      %84 = vector.extract_strided_slice %9 {offsets = [7, 0], sizes = [1, 256], strides = [1, 1]} : vector<8x256xi32> to vector<1x256xi32>
      %85 = vector.shape_cast %84 : vector<1x256xi32> to vector<256xi32>
      %86 = vector.shape_cast %85 : vector<256xi32> to vector<1x256xi32>
      %87 = vector.broadcast %86 : vector<1x256xi32> to vector<128x256xi32>
      %88 = arith.cmpi eq, %28, %87 : vector<128x256xi32>
      %89 = arith.extui %88 : vector<128x256xi1> to vector<128x256xi32>
      %90 = arith.sitofp %89 : vector<128x256xi32> to vector<128x256xf32>
      %91 = arith.addf %83, %90 : vector<128x256xf32>
      %c0_9 = arith.constant 0 : index
      %c0_10 = arith.constant 0 : index
      %92 = vector.load %arg11[%c0_9, %c0_10] : memref<16x256xf32, #tpu.memory_space<vmem>>, vector<16x256xf32>
      %c0_11 = arith.constant 0 : index
      %c0_12 = arith.constant 0 : index
      %93 = vector.load %arg3[%c0_11, %c0_12] : memref<16x128xbf16, #tpu.memory_space<vmem>>, vector<16x128xbf16>
      %94 = arith.truncf %91 : vector<128x256xf32> to vector<128x256xbf16>
      %cst_13 = arith.constant dense<0.000000e+00> : vector<16x256xf32>
      %95 = tpu.matmul %93, %94, %cst_13 {dimension_numbers = #tpu.dot_dimension_numbers<[1], [0], [0], [1], [0, 0, 1, 1], [], []>} : vector<16x128xbf16>, vector<128x256xbf16>, vector<16x256xf32> -> vector<16x256xf32>
      %96 = arith.addf %92, %95 : vector<16x256xf32>
      %c0_14 = arith.constant 0 : index
      %c0_15 = arith.constant 0 : index
      %97 = vector.load %arg11[%c0_14, %c0_15] : memref<16x256xf32, #tpu.memory_space<vmem>>, vector<16x256xf32>
      tpu.vector_store %arg11[%c0_14, %c0_15], %96 {strides = array<i32>} : memref<16x256xf32, #tpu.memory_space<vmem>>, vector<16x256xf32>,
    } else {
    }
    %c5_i32 = arith.constant 5 : i32
    %25 = arith.cmpi eq, %arg1, %c5_i32 : i32
    %26 = arith.extui %25 : i1 to i32
    %c0_i32_8 = arith.constant 0 : i32
    %27 = arith.cmpi ne, %26, %c0_i32_8 : i32
    scf.if %27 {
      %c0_9 = arith.constant 0 : index
      %c0_10 = arith.constant 0 : index
      %28 = vector.load %arg11[%c0_9, %c0_10] : memref<16x256xf32, #tpu.memory_space<vmem>>, vector<16x256xf32>
      %c0_11 = arith.constant 0 : index
      %c0_12 = arith.constant 0 : index
      %29 = vector.load %arg6[%c0_11, %c0_12] : memref<4x16xf32, #tpu.memory_space<vmem>>, vector<4x16xf32>
      %cst_13 = arith.constant dense<0.000000e+00> : vector<4x256xf32>
      %30 = tpu.matmul %29, %28, %cst_13 {dimension_numbers = #tpu.dot_dimension_numbers<[1], [0], [0], [1], [0, 0, 1, 1], [], []>} : vector<4x16xf32>, vector<16x256xf32>, vector<4x256xf32> -> vector<4x256xf32>
      %c0_14 = arith.constant 0 : index
      %c0_15 = arith.constant 0 : index
      %31 = vector.load %arg7[%c0_14, %c0_15] : memref<4x1xf32, #tpu.memory_space<vmem>>, vector<4x1xf32>
      %32 = vector.broadcast %31 : vector<4x1xf32> to vector<4x256xf32>
      %33 = arith.addf %30, %32 : vector<4x256xf32>
      %cst_16 = arith.constant 0.000000e+00 : f32
      %34 = vector.broadcast %cst_16 : f32 to vector<4x256xf32>
      %35 = arith.maximumf %33, %34 : vector<4x256xf32>
      %c0_17 = arith.constant 0 : index
      %c0_18 = arith.constant 0 : index
      %36 = vector.load %arg8[%c0_17, %c0_18] : memref<16x4xf32, #tpu.memory_space<vmem>>, vector<16x4xf32>
      %cst_19 = arith.constant dense<0.000000e+00> : vector<16x256xf32>
      %37 = tpu.matmul %36, %35, %cst_19 {dimension_numbers = #tpu.dot_dimension_numbers<[1], [0], [0], [1], [0, 0, 1, 1], [], []>} : vector<16x4xf32>, vector<4x256xf32>, vector<16x256xf32> -> vector<16x256xf32>
      %c0_20 = arith.constant 0 : index
      %c0_21 = arith.constant 0 : index
      %38 = vector.load %arg9[%c0_20, %c0_21] : memref<16x1xf32, #tpu.memory_space<vmem>>, vector<16x1xf32>
      %39 = vector.broadcast %38 : vector<16x1xf32> to vector<16x256xf32>
      %40 = arith.addf %37, %39 : vector<16x256xf32>
      %41 = arith.negf %40 : vector<16x256xf32>
      %42 = math.exp %41 : vector<16x256xf32>
      %cst_22 = arith.constant 1.000000e+00 : f32
      %43 = vector.broadcast %cst_22 : f32 to vector<16x256xf32>
      %44 = arith.addf %43, %42 : vector<16x256xf32>
      %45 = arith.divf %43, %44 : vector<16x256xf32>
      %c0_23 = arith.constant 0 : index
      %c0_24 = arith.constant 0 : index
      %46 = vector.load %arg4[%c0_23, %c0_24] : memref<16x256xf32, #tpu.memory_space<vmem>>, vector<16x256xf32>
      %47 = arith.mulf %46, %45 : vector<16x256xf32>
      %c0_25 = arith.constant 0 : index
      %c0_26 = arith.constant 0 : index
      %48 = vector.load %arg10[%c0_25, %c0_26] : memref<16x256xf32, #tpu.memory_space<vmem>>, vector<16x256xf32>
      tpu.vector_store %arg10[%c0_25, %c0_26], %47 {strides = array<i32>} : memref<16x256xf32, #tpu.memory_space<vmem>>, vector<16x256xf32>,
    } else {
    }
    return
  }
  func.func @transform_0(%arg0: i32, %arg1: i32, %arg2: memref<4xi32, #tpu.memory_space<smem>>) -> (i32, i32) {
    %0 = arith.index_cast %arg0 : i32 to index
    %1 = memref.load %arg2[%0] : memref<4xi32, #tpu.memory_space<smem>>
    %2 = arith.addi %1, %arg1 : i32
    %c0_i32 = arith.constant 0 : i32
    %c0_i32_0 = arith.constant 0 : i32
    return %c0_i32, %2 : i32, i32
  }
  func.func @transform_1(%arg0: i32, %arg1: i32, %arg2: memref<4xi32, #tpu.memory_space<smem>>) -> (i32, i32) {
    %c0_i32 = arith.constant 0 : i32
    %c0_i32_0 = arith.constant 0 : i32
    return %c0_i32, %arg0 : i32, i32
  }
  func.func @transform_2(%arg0: i32, %arg1: i32, %arg2: memref<4xi32, #tpu.memory_space<smem>>) -> (i32, i32) {
    %c0_i32 = arith.constant 0 : i32
    %c0_i32_0 = arith.constant 0 : i32
    return %c0_i32, %arg0 : i32, i32
  }
  func.func @transform_3(%arg0: i32, %arg1: i32, %arg2: memref<4xi32, #tpu.memory_space<smem>>) -> (i32, i32) {
    %c0_i32 = arith.constant 0 : i32
    %c0_i32_0 = arith.constant 0 : i32
    %c0_i32_1 = arith.constant 0 : i32
    return %c0_i32, %c0_i32_0 : i32, i32
  }
  func.func @transform_4(%arg0: i32, %arg1: i32, %arg2: memref<4xi32, #tpu.memory_space<smem>>) -> (i32, i32) {
    %c0_i32 = arith.constant 0 : i32
    %c0_i32_0 = arith.constant 0 : i32
    %c0_i32_1 = arith.constant 0 : i32
    return %c0_i32, %c0_i32_0 : i32, i32
  }
  func.func @transform_5(%arg0: i32, %arg1: i32, %arg2: memref<4xi32, #tpu.memory_space<smem>>) -> (i32, i32) {
    %c0_i32 = arith.constant 0 : i32
    %c0_i32_0 = arith.constant 0 : i32
    %c0_i32_1 = arith.constant 0 : i32
    return %c0_i32, %c0_i32_0 : i32, i32
  }
  func.func @transform_6(%arg0: i32, %arg1: i32, %arg2: memref<4xi32, #tpu.memory_space<smem>>) -> (i32, i32) {
    %c0_i32 = arith.constant 0 : i32
    %c0_i32_0 = arith.constant 0 : i32
    %c0_i32_1 = arith.constant 0 : i32
    return %c0_i32, %c0_i32_0 : i32, i32
  }
  func.func @transform_7(%arg0: i32, %arg1: i32, %arg2: memref<4xi32, #tpu.memory_space<smem>>) -> (i32, i32) {
    %c0_i32 = arith.constant 0 : i32
    %c0_i32_0 = arith.constant 0 : i32
    return %c0_i32, %arg0 : i32, i32
  }
}

</mosaic_0001>

<llo_original>
// kernel: _se_forward_impl.1
$region0: #{_se_forward_impl.1}
  #allocation0 [shape = 'u32[]', space=smem, size = 0x4, offset = 0x4, fixed_abs, tag = 'smem constant byte address 0x4 - core index']
  #allocation1 [shape = 'u32[144,128]{1,0:T(1,128)}', space=vmem, size = 0x12000, scoped, tag = 'internal scratch']
  #allocation2 [shape = 'f32[16,256]{1,0:T(8,128)}', space=vmem, size = 0x4000, scoped, tag = 'scratch operand']
  #allocation3 [shape = 's32[1]{0}', space=sflag, size = 0x4, scoped, tag = 'scoped memory for _se_forward_impl.1']
  #allocation4 [shape = 'u8[512]{0}', space=smem, size = 0x200, scoped, tag = 'prefetched SMEM operand 0']
  %s0 = inlined_call_operand.vmem [shape: s32[4], index: 0, kind: input, shape index: {}]
  %s1 = inlined_call_operand.vmem [shape: bf16[16,1024], index: 1, kind: input, shape index: {}]
  %s2 = inlined_call_operand.vmem [shape: f32[16,1024], index: 2, kind: input, shape index: {}]
  %s3 = inlined_call_operand.vmem [shape: s32[8,1024], index: 3, kind: input, shape index: {}]
  %s4 = inlined_call_operand.vmem [shape: f32[4,16], index: 4, kind: input, shape index: {}]
  %s5 = inlined_call_operand.vmem [shape: f32[4,1], index: 5, kind: input, shape index: {}]
  %s6 = inlined_call_operand.vmem [shape: f32[16,4], index: 6, kind: input, shape index: {}]
  %s7 = inlined_call_operand.vmem [shape: f32[16,1], index: 7, kind: input, shape index: {}]
  %s8 = inlined_call_operand.vmem [shape: f32[16,1024], index: 8, kind: output, shape index: {}]
  %s9 = sld [smem:[#allocation0]]
  $region156: #{_se_forward_impl.1} parent=0
    _
  %s11 = ssub.s32 1, %s9
  %s12 = scalar_select 0, %s11, %s9
  %s13 = sshll.u32 %s0, 4
  %s14 = int_to_ptr.vmem [resolvable:$true] %s13
  %16 = dma.vmem_to_smem %s14, 16, [#allocation4], [#allocation3]
  %17 = dma.done [#allocation3], 16
  %18 = sfence
  $region1: #{_se_forward_impl.1} parent=0
    #allocation5 [shape = 'u8[8192]{0}', space=vmem, size = 0x2000, scoped, tag = 'input window, operand 1']
    #allocation6 [shape = 'u8[32768]{0}', space=vmem, size = 0x8000, scoped, tag = 'input window, operand 2']
    #allocation7 [shape = 'u8[32768]{0}', space=vmem, size = 0x8000, scoped, tag = 'output window, operand 0']
    loop: start=0, step=1, limit=26
    $region2: #{_se_forward_impl.1} parent=1 // loop_pre_header
      _
    $region3: #{_se_forward_impl.1} parent=1 // loop_header
      %s20 = sphi 0, %s24
      %p21 = scmp.ge.s32.totalorder %s20, 26
      %s27 = sphi 0, %s39
      %s28 = sphi 0, %s35
      %s29 = sphi 0, %s27
      %s30 = sphi 0, %s28
      %s31 = sphi 0, %s29
      %s32 = sphi 0, %s30
      %s46 = sphi 0, %s48
      %s49 = sphi 0, %s46
      %s50 = sphi 0, %s49
      %s66 = sphi 0, %s50
      %s72 = sphi 0, %s74
      %s75 = sphi 0, %s72
      %s76 = sphi 0, %s75
      %s92 = sphi 0, %s76
      %s98 = sphi 0, %s100
      %s101 = sphi 0, %s98
      %s102 = sphi 0, %s101
      %s118 = sphi 0, %s102
      %s122 = sphi 0, %s122
      %s124 = sphi 0, %s122
      %s125 = sphi 0, %s124
      %s139 = sphi 0, %s125
      %s143 = sphi 0, %s143
      %s145 = sphi 0, %s143
      %s146 = sphi 0, %s145
      %s160 = sphi 0, %s146
      %s164 = sphi 0, %s164
      %s166 = sphi 0, %s164
      %s167 = sphi 0, %s166
      %s181 = sphi 0, %s167
      %s185 = sphi 0, %s185
      %s187 = sphi 0, %s185
      %s188 = sphi 0, %s187
      %s202 = sphi 0, %s188
      %s208 = sphi 0, %s210
      %s211 = sphi 0, %s208
      %s212 = sphi 0, %s211
      %s228 = sphi 0, %s212
    $region4: #{_se_forward_impl.1} parent=1 // loop_header_branch
      %23 = sbr.rel (%p21) target = $region8
    $region5: #{_se_forward_impl.1} parent=1 // loop_body
      %s25 = ssub.s32 %s20, 1
      %s26 = ssub.s32 %s20, 2
      %s33 = sadd.s32 1, %s28
      %p34 = scmp.ge.s32.totalorder %s33, 6
      %s35 = scalar_select %p34, 0, %s33
      %s36 = sadd.s32 1, %s27
      %s37 = scalar_select %p34, %s36, %s27
      %p38 = scmp.ge.s32.totalorder %s37, 4
      %s39 = scalar_select %p38, 0, %s37
      %s40 = sld [smem:[#allocation4 + %s27]]
      %s41 = sadd.s32 %s40, %s28
      %s42 = sld [smem:[#allocation4 + %s39]]
      %s43 = sadd.s32 %s42, %s35
      %s44 = ssub.s32 %s41, %s43
      %p45 = scmp.eq.s32.totalorder %s44, 0
      %s47 = sadd.s32 %s46, 1
      %s48 = scalar_select %p45, %s46, %s47
      %p51 = pneg %p45
      %p52 = scmp.eq.s32.totalorder %s20, 23
      %p53 = por %p51, %p52
      %p54 = scmp.ne.s32.totalorder %s46, %s49
      %p55 = scmp.eq.s32.totalorder %s20, 0
      %p56 = por %p54, %p55
      %p57 = scmp.ne.s32.totalorder %s46, %s49
      %p58 = scmp.eq.s32.totalorder %s25, 23
      %p59 = por %p57, %p58
      %p60 = scmp.ne.s32.totalorder %s49, %s50
      %p61 = scmp.eq.s32.totalorder %s25, 0
      %p62 = por %p60, %p61
      %p63 = scmp.ne.s32.totalorder %s49, %s50
      %p64 = scmp.eq.s32.totalorder %s26, 23
      %p65 = por %p63, %p64
      %p67 = scmp.ne.s32.totalorder %s50, %s66
      %p68 = scmp.eq.s32.totalorder %s26, 0
      %p69 = por %p67, %p68
      %s70 = ssub.s32 %s27, %s39
      %p71 = scmp.eq.s32.totalorder %s70, 0
      %s73 = sadd.s32 %s72, 1
      %s74 = scalar_select %p71, %s72, %s73
      %p77 = pneg %p71
      %p78 = scmp.eq.s32.totalorder %s20, 23
      %p79 = por %p77, %p78
      %p80 = scmp.ne.s32.totalorder %s72, %s75
      %p81 = scmp.eq.s32.totalorder %s20, 0
      %p82 = por %p80, %p81
      %p83 = scmp.ne.s32.totalorder %s72, %s75
      %p84 = scmp.eq.s32.totalorder %s25, 23
      %p85 = por %p83, %p84
      %p86 = scmp.ne.s32.totalorder %s75, %s76
      %p87 = scmp.eq.s32.totalorder %s25, 0
      %p88 = por %p86, %p87
      %p89 = scmp.ne.s32.totalorder %s75, %s76
      %p90 = scmp.eq.s32.totalorder %s26, 23
      %p91 = por %p89, %p90
      %p93 = scmp.ne.s32.totalorder %s76, %s92
      %p94 = scmp.eq.s32.totalorder %s26, 0
      %p95 = por %p93, %p94
      %s96 = ssub.s32 %s27, %s39
      %p97 = scmp.eq.s32.totalorder %s96, 0
      %s99 = sadd.s32 %s98, 1
      %s100 = scalar_select %p97, %s98, %s99
      %p103 = pneg %p97
      %p104 = scmp.eq.s32.totalorder %s20, 23
      %p105 = por %p103, %p104
      %p106 = scmp.ne.s32.totalorder %s98, %s101
      %p107 = scmp.eq.s32.totalorder %s20, 0
      %p108 = por %p106, %p107
      %p109 = scmp.ne.s32.totalorder %s98, %s101
      %p110 = scmp.eq.s32.totalorder %s25, 23
      %p111 = por %p109, %p110
      %p112 = scmp.ne.s32.totalorder %s101, %s102
      %p113 = scmp.eq.s32.totalorder %s25, 0
      %p114 = por %p112, %p113
      %p115 = scmp.ne.s32.totalorder %s101, %s102
      %p116 = scmp.eq.s32.totalorder %s26, 23
      %p117 = por %p115, %p116
      %p119 = scmp.ne.s32.totalorder %s102, %s118
      %p120 = scmp.eq.s32.totalorder %s26, 0
      %p121 = por %p119, %p120
      %s123 = sadd.s32 %s122, 1
      %p126 = scmp.eq.s32.totalorder %s20, 23
      %p127 = scmp.ne.s32.totalorder %s122, %s124
      %p128 = scmp.eq.s32.totalorder %s20, 0
      %p129 = por %p127, %p128
      %p130 = scmp.ne.s32.totalorder %s122, %s124
      %p131 = scmp.eq.s32.totalorder %s25, 23
      %p132 = por %p130, %p131
      %p133 = scmp.ne.s32.totalorder %s124, %s125
      %p134 = scmp.eq.s32.totalorder %s25, 0
      %p135 = por %p133, %p134
      %p136 = scmp.ne.s32.totalorder %s124, %s125
      %p137 = scmp.eq.s32.totalorder %s26, 23
      %p138 = por %p136, %p137
      %p140 = scmp.ne.s32.totalorder %s125, %s139
      %p141 = scmp.eq.s32.totalorder %s26, 0
      %p142 = por %p140, %p141
      %s144 = sadd.s32 %s143, 1
      %p147 = scmp.eq.s32.totalorder %s20, 23
      %p148 = scmp.ne.s32.totalorder %s143, %s145
      %p149 = scmp.eq.s32.totalorder %s20, 0
      %p150 = por %p148, %p149
      %p151 = scmp.ne.s32.totalorder %s143, %s145
      %p152 = scmp.eq.s32.totalorder %s25, 23
      %p153 = por %p151, %p152
      %p154 = scmp.ne.s32.totalorder %s145, %s146
      %p155 = scmp.eq.s32.totalorder %s25, 0
      %p156 = por %p154, %p155
      %p157 = scmp.ne.s32.totalorder %s145, %s146
      %p158 = scmp.eq.s32.totalorder %s26, 23
      %p159 = por %p157, %p158
      %p161 = scmp.ne.s32.totalorder %s146, %s160
      %p162 = scmp.eq.s32.totalorder %s26, 0
      %p163 = por %p161, %p162
      %s165 = sadd.s32 %s164, 1
      %p168 = scmp.eq.s32.totalorder %s20, 23
      %p169 = scmp.ne.s32.totalorder %s164, %s166
      %p170 = scmp.eq.s32.totalorder %s20, 0
      %p171 = por %p169, %p170
      %p172 = scmp.ne.s32.totalorder %s164, %s166
      %p173 = scmp.eq.s32.totalorder %s25, 23
      %p174 = por %p172, %p173
      %p175 = scmp.ne.s32.totalorder %s166, %s167
      %p176 = scmp.eq.s32.totalorder %s25, 0
      %p177 = por %p175, %p176
      %p178 = scmp.ne.s32.totalorder %s166, %s167
      %p179 = scmp.eq.s32.totalorder %s26, 23
      %p180 = por %p178, %p179
      %p182 = scmp.ne.s32.totalorder %s167, %s181
      %p183 = scmp.eq.s32.totalorder %s26, 0
      %p184 = por %p182, %p183
      %s186 = sadd.s32 %s185, 1
      %p189 = scmp.eq.s32.totalorder %s20, 23
      %p190 = scmp.ne.s32.totalorder %s185, %s187
      %p191 = scmp.eq.s32.totalorder %s20, 0
      %p192 = por %p190, %p191
      %p193 = scmp.ne.s32.totalorder %s185, %s187
      %p194 = scmp.eq.s32.totalorder %s25, 23
      %p195 = por %p193, %p194
      %p196 = scmp.ne.s32.totalorder %s187, %s188
      %p197 = scmp.eq.s32.totalorder %s25, 0
      %p198 = por %p196, %p197
      %p199 = scmp.ne.s32.totalorder %s187, %s188
      %p200 = scmp.eq.s32.totalorder %s26, 23
      %p201 = por %p199, %p200
      %p203 = scmp.ne.s32.totalorder %s188, %s202
      %p204 = scmp.eq.s32.totalorder %s26, 0
      %p205 = por %p203, %p204
      %s206 = ssub.s32 %s27, %s39
      %p207 = scmp.eq.s32.totalorder %s206, 0
      %s209 = sadd.s32 %s208, 1
      %s210 = scalar_select %p207, %s208, %s209
      %p213 = pneg %p207
      %p214 = scmp.eq.s32.totalorder %s20, 23
      %p215 = por %p213, %p214
      %p216 = scmp.ne.s32.totalorder %s208, %s211
      %p217 = scmp.eq.s32.totalorder %s20, 0
      %p218 = por %p216, %p217
      %p219 = scmp.ne.s32.totalorder %s208, %s211
      %p220 = scmp.eq.s32.totalorder %s25, 23
      %p221 = por %p219, %p220
      %p222 = scmp.ne.s32.totalorder %s211, %s212
      %p223 = scmp.eq.s32.totalorder %s25, 0
      %p224 = por %p222, %p223
      %p225 = scmp.ne.s32.totalorder %s211, %s212
      %p226 = scmp.eq.s32.totalorder %s26, 23
      %p227 = por %p225, %p226
      %p229 = scmp.ne.s32.totalorder %s212, %s228
      %p230 = scmp.eq.s32.totalorder %s26, 0
      %p231 = por %p229, %p230
      %p232 = scmp.le.s32.totalorder 1, %s20
      %p233 = scmp.lt.s32.totalorder %s20, 25
      %p234 = pnand %p232, %p233
      %p235 = pneg %p234
      // Predicated region
      $region9: #{_se_forward_impl.1} parent=5 // pred_check
        _
      $region10: #{_se_forward_impl.1} parent=5 // pred_check_branch
        %237 = sbr.rel (%p234) target = $region12
      $region11: #{_se_forward_impl.1} parent=5 // pred_region
        %s238 = ssub.s32 %s20, 1
        // Predicated region
        $region13: #{_se_forward_impl.1} parent=11 // pred_check
          %p239 = pneg %p135
        $region14: #{_se_forward_impl.1} parent=11 // pred_check_branch
          %241 = sbr.rel (%p239) target = $region16
        $region15: #{_se_forward_impl.1} parent=11 // pred_region
          _
        $region16: #{_se_forward_impl.1} parent=11 // pred_fallthru
          _
        // Predicated region
        $region17: #{_se_forward_impl.1} parent=11 // pred_check
          %p242 = pneg %p156
        $region18: #{_se_forward_impl.1} parent=11 // pred_check_branch
          %244 = sbr.rel (%p242) target = $region20
        $region19: #{_se_forward_impl.1} parent=11 // pred_region
          _
        $region20: #{_se_forward_impl.1} parent=11 // pred_fallthru
          _
        // Predicated region
        $region21: #{_se_forward_impl.1} parent=11 // pred_check
          %p245 = pneg %p177
        $region22: #{_se_forward_impl.1} parent=11 // pred_check_branch
          %247 = sbr.rel (%p245) target = $region24
        $region23: #{_se_forward_impl.1} parent=11 // pred_region
          _
        $region24: #{_se_forward_impl.1} parent=11 // pred_fallthru
          _
        // Predicated region
        $region25: #{_se_forward_impl.1} parent=11 // pred_check
          %p248 = pneg %p198
        $region26: #{_se_forward_impl.1} parent=11 // pred_check_branch
          %250 = sbr.rel (%p248) target = $region28
        $region27: #{_se_forward_impl.1} parent=11 // pred_region
          _
        $region28: #{_se_forward_impl.1} parent=11 // pred_fallthru
          _
      $region12: #{_se_forward_impl.1} parent=5 // pred_fallthru
        _
      %p251 = scmp.lt.s32.totalorder %s20, 24
      // Predicated region
      $region29: #{_se_forward_impl.1} parent=5 // pred_check
        %p252 = pneg %p251
      $region30: #{_se_forward_impl.1} parent=5 // pred_check_branch
        %254 = sbr.rel (%p252) target = $region32
      $region31: #{_se_forward_impl.1} parent=5 // pred_region
        // Predicated region
        $region33: #{_se_forward_impl.1} parent=31 // pred_check
          %p255 = pneg %p56
        $region34: #{_se_forward_impl.1} parent=31 // pred_check_branch
          %257 = sbr.rel (%p255) target = $region36
        $region35: #{_se_forward_impl.1} parent=31 // pred_region
          %s258 = sand.u32 %s46, 1
          %s259 = sand.u32 %s46, 1
          %s260 = smul.addr %s259, 8
          %s261 = scalar_lea.vmem [#allocation5], %s260
          %s262 = sld [smem:[#allocation4 + %s27]]
          %s263 = sadd.s32 %s262, %s28
          %s264 = smul.addr %s263, 4
          %s265 = scalar_lea.vmem %s1, %s264
          // Predicated region
          $region37: #{_se_forward_impl.1} parent=35 // pred_check
            _
          $region38: #{_se_forward_impl.1} parent=35 // pred_check_branch
            %267 = sbr.rel (0) target = $region40
          $region39: #{_se_forward_impl.1} parent=35 // pred_region
            // Predicated region
            $region41: #{_se_forward_impl.1} parent=39 // pred_check
              _
            $region42: #{_se_forward_impl.1} parent=39 // pred_check_branch
              %269 = sbr.rel target = $region44
            $region43: #{_se_forward_impl.1} parent=39 // pred_region
              // Predicated region
              $region56: #{_se_forward_impl.1} parent=43 // pred_check
                _
              $region57: #{_se_forward_impl.1} parent=43 // pred_check_branch
                %286 = sbr.rel (0) target = $region59
              $region58: #{_se_forward_impl.1} parent=43 // pred_region
                loop: start=0, step=1, limit=1
                $region60: #{_se_forward_impl.1} parent=58 // loop_pre_header
                  _
                $region61: #{_se_forward_impl.1} parent=58 // loop_header
                  %s288 = sphi 0, %s292
                  %p289 = scmp.ge.s32.totalorder %s288, 1
                  %s293 = sphi %s265, %s265
                  %s294 = sphi %s261, %s261
                $region62: #{_se_forward_impl.1} parent=58 // loop_header_branch
                  %291 = sbr.rel (%p289) target = $region66
                $region63: #{_se_forward_impl.1} parent=58 // loop_body
                  _
                $region64: #{_se_forward_impl.1} parent=58 // loop_footer
                  %s292 = sadd.s32 1, %s288
                $region65: #{_se_forward_impl.1} parent=58 // loop_footer_branch
                  %287 = sbr.rel target = $region61
                $region66: #{_se_forward_impl.1} parent=58 // loop_exit
                  _
                loop: start=0, step=1, limit=1
                $region67: #{_se_forward_impl.1} parent=58 // loop_pre_header
                  _
                $region68: #{_se_forward_impl.1} parent=58 // loop_header
                  %s297 = sphi 0, %s301
                  %p298 = scmp.ge.s32.totalorder %s297, 1
                  %s302 = sphi %s265, %s265
                  %s303 = sphi %s261, %s261
                $region69: #{_se_forward_impl.1} parent=58 // loop_header_branch
                  %300 = sbr.rel (%p298) target = $region73
                $region70: #{_se_forward_impl.1} parent=58 // loop_body
                  %v304 = vld [vmem:[%s302] sm:$0xf]
                  %305 = vst [vmem:[%s303] sm:$0xf] %v304
                  %v306 = vld [vmem:[%s302 + $0x20] sm:$0xf]
                  %307 = vst [vmem:[%s303 + $0x4] sm:$0xf] %v306
                $region71: #{_se_forward_impl.1} parent=58 // loop_footer
                  %s301 = sadd.s32 1, %s297
                $region72: #{_se_forward_impl.1} parent=58 // loop_footer_branch
                  %296 = sbr.rel target = $region68
                $region73: #{_se_forward_impl.1} parent=58 // loop_exit
                  _
              $region59: #{_se_forward_impl.1} parent=43 // pred_fallthru
                _
            $region44: #{_se_forward_impl.1} parent=39 // pred_fallthru
              _
            // Predicated region
            $region45: #{_se_forward_impl.1} parent=39 // pred_check
              _
            $region46: #{_se_forward_impl.1} parent=39 // pred_check_branch
              %271 = sbr.rel (0) target = $region48
            $region47: #{_se_forward_impl.1} parent=39 // pred_region
              loop: start=0, step=1, limit=1
              $region49: #{_se_forward_impl.1} parent=47 // loop_pre_header
                _
              $region50: #{_se_forward_impl.1} parent=47 // loop_header
                %s274 = sphi 0, %s278
                %p275 = scmp.ge.s32.totalorder %s274, 1
                %s279 = sphi %s265, %s265
                %s280 = sphi %s261, %s261
              $region51: #{_se_forward_impl.1} parent=47 // loop_header_branch
                %277 = sbr.rel (%p275) target = $region55
              $region52: #{_se_forward_impl.1} parent=47 // loop_body
                %v281 = vld [vmem:[%s279] sm:$0xf]
                %282 = vst [vmem:[%s280] sm:$0xf] %v281
                %v283 = vld [vmem:[%s279 + $0x20] sm:$0xf]
                %284 = vst [vmem:[%s280 + $0x4] sm:$0xf] %v283
              $region53: #{_se_forward_impl.1} parent=47 // loop_footer
                %s278 = sadd.s32 1, %s274
              $region54: #{_se_forward_impl.1} parent=47 // loop_footer_branch
                %273 = sbr.rel target = $region50
              $region55: #{_se_forward_impl.1} parent=47 // loop_exit
                _
            $region48: #{_se_forward_impl.1} parent=39 // pred_fallthru
              _
          $region40: #{_se_forward_impl.1} parent=35 // pred_fallthru
            _
          %308 = vnop
        $region36: #{_se_forward_impl.1} parent=31 // pred_fallthru
          _
        // Predicated region
        $region74: #{_se_forward_impl.1} parent=31 // pred_check
          %p309 = pneg %p82
        $region75: #{_se_forward_impl.1} parent=31 // pred_check_branch
          %311 = sbr.rel (%p309) target = $region77
        $region76: #{_se_forward_impl.1} parent=31 // pred_region
          %s312 = sand.u32 %s72, 1
          %s313 = sand.u32 %s72, 1
          %s314 = smul.addr %s313, 32
          %s315 = scalar_lea.vmem [#allocation6], %s314
          %s316 = smul.u32 2, %s27
          %s317 = smul.addr %s316, 8
          %s318 = scalar_lea.vmem %s2, %s317
          // Predicated region
          $region78: #{_se_forward_impl.1} parent=76 // pred_check
            _
          $region79: #{_se_forward_impl.1} parent=76 // pred_check_branch
            %320 = sbr.rel (0) target = $region81
          $region80: #{_se_forward_impl.1} parent=76 // pred_region
            // Predicated region
            $region82: #{_se_forward_impl.1} parent=80 // pred_check
              _
            $region83: #{_se_forward_impl.1} parent=80 // pred_check_branch
              %322 = sbr.rel (0) target = $region85
            $region84: #{_se_forward_impl.1} parent=80 // pred_region
              loop: start=0, step=1, limit=1
              $region86: #{_se_forward_impl.1} parent=84 // loop_pre_header
                _
              $region87: #{_se_forward_impl.1} parent=84 // loop_header
                %s324 = sphi 0, %s328
                %p325 = scmp.ge.s32.totalorder %s324, 1
                %s329 = sphi %s318, %s318
                %s330 = sphi %s315, %s315
              $region88: #{_se_forward_impl.1} parent=84 // loop_header_branch
                %327 = sbr.rel (%p325) target = $region92
              $region89: #{_se_forward_impl.1} parent=84 // loop_body
                %v331 = vld [vmem:[%s329] sm:$0xff]
                %332 = vst [vmem:[%s330] sm:$0xff] %v331
                %v333 = vld [vmem:[%s329 + $0x8] sm:$0xff]
                %334 = vst [vmem:[%s330 + $0x8] sm:$0xff] %v333
                %v335 = vld [vmem:[%s329 + $0x40] sm:$0xff]
                %336 = vst [vmem:[%s330 + $0x10] sm:$0xff] %v335
                %v337 = vld [vmem:[%s329 + $0x48] sm:$0xff]
                %338 = vst [vmem:[%s330 + $0x18] sm:$0xff] %v337
              $region90: #{_se_forward_impl.1} parent=84 // loop_footer
                %s328 = sadd.s32 1, %s324
              $region91: #{_se_forward_impl.1} parent=84 // loop_footer_branch
                %323 = sbr.rel target = $region87
              $region92: #{_se_forward_impl.1} parent=84 // loop_exit
                _
            $region85: #{_se_forward_impl.1} parent=80 // pred_fallthru
              _
            // Predicated region
            $region93: #{_se_forward_impl.1} parent=80 // pred_check
              _
            $region94: #{_se_forward_impl.1} parent=80 // pred_check_branch
              %340 = sbr.rel target = $region96
            $region95: #{_se_forward_impl.1} parent=80 // pred_region
              _
            $region96: #{_se_forward_impl.1} parent=80 // pred_fallthru
              _
          $region81: #{_se_forward_impl.1} parent=76 // pred_fallthru
            _
          %341 = vnop
        $region77: #{_se_forward_impl.1} parent=31 // pred_fallthru
          _
        // Predicated region
        $region97: #{_se_forward_impl.1} parent=31 // pred_check
          %p342 = pneg %p108
        $region98: #{_se_forward_impl.1} parent=31 // pred_check_branch
          %344 = sbr.rel (%p342) target = $region100
        $region99: #{_se_forward_impl.1} parent=31 // pred_region
          %s345 = smul.u32 2, %s27
          %p346 = scmp.lt.s32.totalorder %s345, 7
          %s347 = scalar_select %p346, %s345, 7
          %s348 = smul.addr %s347, 8
          %s349 = scalar_lea.vmem %s3, %s348
          %s350 = smul.u32 2, %s27
        $region100: #{_se_forward_impl.1} parent=31 // pred_fallthru
          _
      $region32: #{_se_forward_impl.1} parent=5 // pred_fallthru
        _
      %p351 = scmp.le.s32.totalorder 1, %s20
      %p352 = scmp.lt.s32.totalorder %s20, 25
      %p353 = pnand %p351, %p352
      %p354 = pneg %p353
      // Predicated region
      $region101: #{_se_forward_impl.1} parent=5 // pred_check
        _
      $region102: #{_se_forward_impl.1} parent=5 // pred_check_branch
        %356 = sbr.rel (%p353) target = $region104
      $region103: #{_se_forward_impl.1} parent=5 // pred_region
        %s357 = ssub.s32 %s20, 1
        %s358 = sand.u32 %s49, 1
        %s359 = sand.u32 %s49, 1
        %s360 = smul.addr %s359, 8
        %s361 = scalar_lea.vmem [#allocation5], %s360
        // Predicated region
        $region105: #{_se_forward_impl.1} parent=103 // pred_check
          %p362 = pneg %p62
        $region106: #{_se_forward_impl.1} parent=103 // pred_check_branch
          %364 = sbr.rel (%p362) target = $region108
        $region107: #{_se_forward_impl.1} parent=103 // pred_region
          _
        $region108: #{_se_forward_impl.1} parent=103 // pred_fallthru
          _
        %s365 = sand.u32 %s75, 1
        %s366 = sand.u32 %s75, 1
        %s367 = smul.addr %s366, 32
        %s368 = scalar_lea.vmem [#allocation6], %s367
        // Predicated region
        $region109: #{_se_forward_impl.1} parent=103 // pred_check
          %p369 = pneg %p88
        $region110: #{_se_forward_impl.1} parent=103 // pred_check_branch
          %371 = sbr.rel (%p369) target = $region112
        $region111: #{_se_forward_impl.1} parent=103 // pred_region
          _
        $region112: #{_se_forward_impl.1} parent=103 // pred_fallthru
          _
        %s372 = sand.u32 %s49, 1
        %s373 = sand.u32 %s49, 1
        %s374 = smul.addr %s373, 8
        %s375 = scalar_lea.vmem [#allocation5], %s374
        %p376 = pneg %p62
        %p377 = pneg %p59
        %s378 = sand.u32 %s75, 1
        %s379 = sand.u32 %s75, 1
        %s380 = smul.addr %s379, 32
        %s381 = scalar_lea.vmem [#allocation6], %s380
        %p382 = pneg %p88
        %p383 = pneg %p85
        %s384 = smul.u32 2, %s29
        %p385 = scmp.lt.s32.totalorder %s384, 7
        %s386 = scalar_select %p385, %s384, 7
        %s387 = smul.addr %s386, 8
        %s388 = scalar_lea.vmem %s3, %s387
        %p389 = pneg %p114
        %p390 = pneg %p111
        %p391 = pneg %p135
        %p392 = pneg %p132
        %p393 = pneg %p156
        %p394 = pneg %p153
        %p395 = pneg %p177
        %p396 = pneg %p174
        %p397 = pneg %p198
        %p398 = pneg %p195
        %p399 = pneg %p224
        %p400 = pneg %p221
        %s401 = sand.u32 %s211, 1
        %s402 = sand.u32 %s211, 1
        %s403 = smul.addr %s402, 32
        %s404 = scalar_lea.vmem [#allocation7], %s403
        %s405 = sld [smem:[#allocation4 + %s29]]
        %s406 = sadd.s32 %s405, %s30
        %s407 = smul.u32 2, %s29
        %s408 = smul.u32 2, %s29
        %p409 = scmp.lt.s32.totalorder %s408, 7
        %s410 = scalar_select %p409, %s408, 7
        %s411 = smul.addr %s410, 8
        %s412 = scalar_lea.vmem %s3, %s411
        %s413 = smul.u32 2, %s29
        %s414 = smul.u32 2, %s29
        %p416 = scmp.eq.s32.totalorder %s30, 0
        // Predicated region
        $region113: #{_se_forward_impl.1} parent=103 // pred_check
          %p417 = pneg %p416
        $region114: #{_se_forward_impl.1} parent=103 // pred_check_branch
          %419 = sbr.rel (%p417) target = $region116
        $region115: #{_se_forward_impl.1} parent=103 // pred_region
          %420 = vst [vmem:[#allocation2] sm:$0xff] 0.0
          %421 = vst [vmem:[#allocation2 + $0x8] sm:$0xff] 0.0
          %422 = vst [vmem:[#allocation2 + $0x10] sm:$0xff] 0.0
          %423 = vst [vmem:[#allocation2 + $0x18] sm:$0xff] 0.0
        $region116: #{_se_forward_impl.1} parent=103 // pred_fallthru
          _
        %s424 = sld [smem:[#allocation4 + %s29]]
        %s425 = sadd.s32 %s424, %s30
        %v426 = vld [vmem:[%s412] sm:$0xff]
        %v427 = vld [vmem:[%s412 + $0x8] sm:$0xff]
        %s428 = smul.u32 %s425, 128
        %v429 = vstv %s428
        %v430 = vsub.s32 %v426, %v429
        %v431 = vsub.s32 %v427, %v429
        %vm432 = vcmp.ge.s32.totalorder %v430, 0
        %vm433 = vcmp.ge.s32.totalorder %v431, 0
        %vm434 = vcmp.lt.s32.totalorder %v430, 128
        %vm435 = vcmp.lt.s32.totalorder %v431, 128
        %vm436 = vmand %vm432, %vm434
        %vm437 = vmand %vm433, %vm435
        %v438 = vsel %vm436, 1.0, 0.0
        %v439 = vsel %vm437, 1.0, 0.0
        %v440 = vmax.f32 %v438, %v439
        %441 = vmax.xlane.f32.xlu0 %v440
        %v442 = vpop.xlane.xlu0 %441
        %v443 = vrot.slane %v442, 4
        %v444 = vmax.f32 %v442, %v443
        %v445 = vrot.slane %v444, 2
        %v446 = vmax.f32 %v444, %v445
        %v447 = vrot.slane %v446, 1
        %v448 = vmax.f32 %v446, %v447
        %s449 = vtos %v448
        %p450 = scmp.gt.f32.partialorder %s449, 0.0
        // Predicated region
        $region117: #{_se_forward_impl.1} parent=103 // pred_check
          %p451 = pneg %p450
        $region118: #{_se_forward_impl.1} parent=103 // pred_check_branch
          %453 = sbr.rel (%p451) target = $region120
        $region119: #{_se_forward_impl.1} parent=103 // pred_region
          %v454 = vlaneseq
          %v455 = vshrl.u32 %v454, 7
          %v456 = vadd.s32 %v455, 8
          %v457 = vadd.s32 %v455, 16
          %v458 = vadd.s32 %v455, 24
          %v459 = vadd.s32 %v455, 32
          %v460 = vadd.s32 %v455, 40
          %v461 = vadd.s32 %v455, 48
          %v462 = vadd.s32 %v455, 56
          %v463 = vadd.s32 %v455, 64
          %v464 = vadd.s32 %v455, 72
          %v465 = vadd.s32 %v455, 80
          %v466 = vadd.s32 %v455, 88
          %v467 = vadd.s32 %v455, 96
          %v468 = vadd.s32 %v455, 104
          %v469 = vadd.s32 %v455, 112
          %v470 = vadd.s32 %v455, 120
          %v471 = vlaneseq
          %v472 = vshrl.u32 %v471, 7
          %v473 = vsub.s32 0, %v472
          %v474 = vrot.slane %v430, %v473
          %v475 = vlaneseq
          %v476 = vshrl.u32 %v475, 7
          %v477 = vsub.s32 0, %v476
          %v478 = vrot.slane %v431, %v477
          %vm479 = vcmp.eq.s32.totalorder %v455, %v474
          %vm480 = vcmp.eq.s32.totalorder %v455, %v478
          %vm481 = vcmp.eq.s32.totalorder %v456, %v474
          %vm482 = vcmp.eq.s32.totalorder %v456, %v478
          %vm483 = vcmp.eq.s32.totalorder %v457, %v474
          %vm484 = vcmp.eq.s32.totalorder %v457, %v478
          %vm485 = vcmp.eq.s32.totalorder %v458, %v474
          %vm486 = vcmp.eq.s32.totalorder %v458, %v478
          %vm487 = vcmp.eq.s32.totalorder %v459, %v474
          %vm488 = vcmp.eq.s32.totalorder %v459, %v478
          %vm489 = vcmp.eq.s32.totalorder %v460, %v474
          %vm490 = vcmp.eq.s32.totalorder %v460, %v478
          %vm491 = vcmp.eq.s32.totalorder %v461, %v474
          %vm492 = vcmp.eq.s32.totalorder %v461, %v478
          %vm493 = vcmp.eq.s32.totalorder %v462, %v474
          %vm494 = vcmp.eq.s32.totalorder %v462, %v478
          %vm495 = vcmp.eq.s32.totalorder %v463, %v474
          %vm496 = vcmp.eq.s32.totalorder %v463, %v478
          %vm497 = vcmp.eq.s32.totalorder %v464, %v474
          %vm498 = vcmp.eq.s32.totalorder %v464, %v478
          %vm499 = vcmp.eq.s32.totalorder %v465, %v474
          %vm500 = vcmp.eq.s32.totalorder %v465, %v478
          %vm501 = vcmp.eq.s32.totalorder %v466, %v474
          %vm502 = vcmp.eq.s32.totalorder %v466, %v478
          %vm503 = vcmp.eq.s32.totalorder %v467, %v474
          %vm504 = vcmp.eq.s32.totalorder %v467, %v478
          %vm505 = vcmp.eq.s32.totalorder %v468, %v474
          %vm506 = vcmp.eq.s32.totalorder %v468, %v478
          %vm507 = vcmp.eq.s32.totalorder %v469, %v474
          %vm508 = vcmp.eq.s32.totalorder %v469, %v478
          %vm509 = vcmp.eq.s32.totalorder %v470, %v474
          %vm510 = vcmp.eq.s32.totalorder %v470, %v478
          %v511 = vsel %vm479, 1, 0
          %v512 = vsel %vm480, 1, 0
          %v513 = vsel %vm481, 1, 0
          %v514 = vsel %vm482, 1, 0
          %v515 = vsel %vm483, 1, 0
          %v516 = vsel %vm484, 1, 0
          %v517 = vsel %vm485, 1, 0
          %v518 = vsel %vm486, 1, 0
          %v519 = vsel %vm487, 1, 0
          %v520 = vsel %vm488, 1, 0
          %v521 = vsel %vm489, 1, 0
          %v522 = vsel %vm490, 1, 0
          %v523 = vsel %vm491, 1, 0
          %v524 = vsel %vm492, 1, 0
          %v525 = vsel %vm493, 1, 0
          %v526 = vsel %vm494, 1, 0
          %v527 = vsel %vm495, 1, 0
          %v528 = vsel %vm496, 1, 0
          %v529 = vsel %vm497, 1, 0
          %v530 = vsel %vm498, 1, 0
          %v531 = vsel %vm499, 1, 0
          %v532 = vsel %vm500, 1, 0
          %v533 = vsel %vm501, 1, 0
          %v534 = vsel %vm502, 1, 0
          %v535 = vsel %vm503, 1, 0
          %v536 = vsel %vm504, 1, 0
          %v537 = vsel %vm505, 1, 0
          %v538 = vsel %vm506, 1, 0
          %v539 = vsel %vm507, 1, 0
          %v540 = vsel %vm508, 1, 0
          %v541 = vsel %vm509, 1, 0
          %v542 = vsel %vm510, 1, 0
          %v543 = vcvt.s32.f32 %v511
          %v544 = vcvt.s32.f32 %v512
          %v545 = vcvt.s32.f32 %v513
          %v546 = vcvt.s32.f32 %v514
          %v547 = vcvt.s32.f32 %v515
          %v548 = vcvt.s32.f32 %v516
          %v549 = vcvt.s32.f32 %v517
          %v550 = vcvt.s32.f32 %v518
          %v551 = vcvt.s32.f32 %v519
          %v552 = vcvt.s32.f32 %v520
          %v553 = vcvt.s32.f32 %v521
          %v554 = vcvt.s32.f32 %v522
          %v555 = vcvt.s32.f32 %v523
          %v556 = vcvt.s32.f32 %v524
          %v557 = vcvt.s32.f32 %v525
          %v558 = vcvt.s32.f32 %v526
          %v559 = vcvt.s32.f32 %v527
          %v560 = vcvt.s32.f32 %v528
          %v561 = vcvt.s32.f32 %v529
          %v562 = vcvt.s32.f32 %v530
          %v563 = vcvt.s32.f32 %v531
          %v564 = vcvt.s32.f32 %v532
          %v565 = vcvt.s32.f32 %v533
          %v566 = vcvt.s32.f32 %v534
          %v567 = vcvt.s32.f32 %v535
          %v568 = vcvt.s32.f32 %v536
          %v569 = vcvt.s32.f32 %v537
          %v570 = vcvt.s32.f32 %v538
          %v571 = vcvt.s32.f32 %v539
          %v572 = vcvt.s32.f32 %v540
          %v573 = vcvt.s32.f32 %v541
          %v574 = vcvt.s32.f32 %v542
          %v575 = vlaneseq
          %v576 = vshrl.u32 %v575, 7
          %v577 = vsub.s32 1, %v576
          %v578 = vrot.slane %v430, %v577
          %v579 = vlaneseq
          %v580 = vshrl.u32 %v579, 7
          %v581 = vsub.s32 1, %v580
          %v582 = vrot.slane %v431, %v581
          %vm583 = vcmp.eq.s32.totalorder %v455, %v578
          %vm584 = vcmp.eq.s32.totalorder %v455, %v582
          %vm585 = vcmp.eq.s32.totalorder %v456, %v578
          %vm586 = vcmp.eq.s32.totalorder %v456, %v582
          %vm587 = vcmp.eq.s32.totalorder %v457, %v578
          %vm588 = vcmp.eq.s32.totalorder %v457, %v582
          %vm589 = vcmp.eq.s32.totalorder %v458, %v578
          %vm590 = vcmp.eq.s32.totalorder %v458, %v582
          %vm591 = vcmp.eq.s32.totalorder %v459, %v578
          %vm592 = vcmp.eq.s32.totalorder %v459, %v582
          %vm593 = vcmp.eq.s32.totalorder %v460, %v578
          %vm594 = vcmp.eq.s32.totalorder %v460, %v582
          %vm595 = vcmp.eq.s32.totalorder %v461, %v578
          %vm596 = vcmp.eq.s32.totalorder %v461, %v582
          %vm597 = vcmp.eq.s32.totalorder %v462, %v578
          %vm598 = vcmp.eq.s32.totalorder %v462, %v582
          %vm599 = vcmp.eq.s32.totalorder %v463, %v578
          %vm600 = vcmp.eq.s32.totalorder %v463, %v582
          %vm601 = vcmp.eq.s32.totalorder %v464, %v578
          %vm602 = vcmp.eq.s32.totalorder %v464, %v582
          %vm603 = vcmp.eq.s32.totalorder %v465, %v578
          %vm604 = vcmp.eq.s32.totalorder %v465, %v582
          %vm605 = vcmp.eq.s32.totalorder %v466, %v578
          %vm606 = vcmp.eq.s32.totalorder %v466, %v582
          %vm607 = vcmp.eq.s32.totalorder %v467, %v578
          %vm608 = vcmp.eq.s32.totalorder %v467, %v582
          %vm609 = vcmp.eq.s32.totalorder %v468, %v578
          %vm610 = vcmp.eq.s32.totalorder %v468, %v582
          %vm611 = vcmp.eq.s32.totalorder %v469, %v578
          %vm612 = vcmp.eq.s32.totalorder %v469, %v582
          %vm613 = vcmp.eq.s32.totalorder %v470, %v578
          %vm614 = vcmp.eq.s32.totalorder %v470, %v582
          %v615 = vsel %vm583, 1, 0
          %v616 = vsel %vm584, 1, 0
          %v617 = vsel %vm585, 1, 0
          %v618 = vsel %vm586, 1, 0
          %v619 = vsel %vm587, 1, 0
          %v620 = vsel %vm588, 1, 0
          %v621 = vsel %vm589, 1, 0
          %v622 = vsel %vm590, 1, 0
          %v623 = vsel %vm591, 1, 0
          %v624 = vsel %vm592, 1, 0
          %v625 = vsel %vm593, 1, 0
          %v626 = vsel %vm594, 1, 0
          %v627 = vsel %vm595, 1, 0
          %v628 = vsel %vm596, 1, 0
          %v629 = vsel %vm597, 1, 0
          %v630 = vsel %vm598, 1, 0
          %v631 = vsel %vm599, 1, 0
          %v632 = vsel %vm600, 1, 0
          %v633 = vsel %vm601, 1, 0
          %v634 = vsel %vm602, 1, 0
          %v635 = vsel %vm603, 1, 0
          %v636 = vsel %vm604, 1, 0
          %v637 = vsel %vm605, 1, 0
          %v638 = vsel %vm606, 1, 0
          %v639 = vsel %vm607, 1, 0
          %v640 = vsel %vm608, 1, 0
          %v641 = vsel %vm609, 1, 0
          %v642 = vsel %vm610, 1, 0
          %v643 = vsel %vm611, 1, 0
          %v644 = vsel %vm612, 1, 0
          %v645 = vsel %vm613, 1, 0
          %v646 = vsel %vm614, 1, 0
          %v647 = vcvt.s32.f32 %v615
          %v648 = vcvt.s32.f32 %v616
          %v649 = vcvt.s32.f32 %v617
          %v650 = vcvt.s32.f32 %v618
          %v651 = vcvt.s32.f32 %v619
          %v652 = vcvt.s32.f32 %v620
          %v653 = vcvt.s32.f32 %v621
          %v654 = vcvt.s32.f32 %v622
          %v655 = vcvt.s32.f32 %v623
          %v656 = vcvt.s32.f32 %v624
          %v657 = vcvt.s32.f32 %v625
          %v658 = vcvt.s32.f32 %v626
          %v659 = vcvt.s32.f32 %v627
          %v660 = vcvt.s32.f32 %v628
          %v661 = vcvt.s32.f32 %v629
          %v662 = vcvt.s32.f32 %v630
          %v663 = vcvt.s32.f32 %v631
          %v664 = vcvt.s32.f32 %v632
          %v665 = vcvt.s32.f32 %v633
          %v666 = vcvt.s32.f32 %v634
          %v667 = vcvt.s32.f32 %v635
          %v668 = vcvt.s32.f32 %v636
          %v669 = vcvt.s32.f32 %v637
          %v670 = vcvt.s32.f32 %v638
          %v671 = vcvt.s32.f32 %v639
          %v672 = vcvt.s32.f32 %v640
          %v673 = vcvt.s32.f32 %v641
          %v674 = vcvt.s32.f32 %v642
          %v675 = vcvt.s32.f32 %v643
          %v676 = vcvt.s32.f32 %v644
          %v677 = vcvt.s32.f32 %v645
          %v678 = vcvt.s32.f32 %v646
          %v679 = vadd.f32 %v543, %v647
          %v680 = vadd.f32 %v544, %v648
          %v681 = vadd.f32 %v545, %v649
          %v682 = vadd.f32 %v546, %v650
          %v683 = vadd.f32 %v547, %v651
          %v684 = vadd.f32 %v548, %v652
          %v685 = vadd.f32 %v549, %v653
          %v686 = vadd.f32 %v550, %v654
          %v687 = vadd.f32 %v551, %v655
          %v688 = vadd.f32 %v552, %v656
          %v689 = vadd.f32 %v553, %v657
          %v690 = vadd.f32 %v554, %v658
          %v691 = vadd.f32 %v555, %v659
          %v692 = vadd.f32 %v556, %v660
          %v693 = vadd.f32 %v557, %v661
          %v694 = vadd.f32 %v558, %v662
          %v695 = vadd.f32 %v559, %v663
          %v696 = vadd.f32 %v560, %v664
          %v697 = vadd.f32 %v561, %v665
          %v698 = vadd.f32 %v562, %v666
          %v699 = vadd.f32 %v563, %v667
          %v700 = vadd.f32 %v564, %v668
          %v701 = vadd.f32 %v565, %v669
          %v702 = vadd.f32 %v566, %v670
          %v703 = vadd.f32 %v567, %v671
          %v704 = vadd.f32 %v568, %v672
          %v705 = vadd.f32 %v569, %v673
          %v706 = vadd.f32 %v570, %v674
          %v707 = vadd.f32 %v571, %v675
          %v708 = vadd.f32 %v572, %v676
          %v709 = vadd.f32 %v573, %v677
          %v710 = vadd.f32 %v574, %v678
          %v711 = vlaneseq
          %v712 = vshrl.u32 %v711, 7
          %v713 = vsub.s32 2, %v712
          %v714 = vrot.slane %v430, %v713
          %v715 = vlaneseq
          %v716 = vshrl.u32 %v715, 7
          %v717 = vsub.s32 2, %v716
          %v718 = vrot.slane %v431, %v717
          %vm719 = vcmp.eq.s32.totalorder %v455, %v714
          %vm720 = vcmp.eq.s32.totalorder %v455, %v718
          %vm721 = vcmp.eq.s32.totalorder %v456, %v714
          %vm722 = vcmp.eq.s32.totalorder %v456, %v718
          %vm723 = vcmp.eq.s32.totalorder %v457, %v714
          %vm724 = vcmp.eq.s32.totalorder %v457, %v718
          %vm725 = vcmp.eq.s32.totalorder %v458, %v714
          %vm726 = vcmp.eq.s32.totalorder %v458, %v718
          %vm727 = vcmp.eq.s32.totalorder %v459, %v714
          %vm728 = vcmp.eq.s32.totalorder %v459, %v718
          %vm729 = vcmp.eq.s32.totalorder %v460, %v714
          %vm730 = vcmp.eq.s32.totalorder %v460, %v718
          %vm731 = vcmp.eq.s32.totalorder %v461, %v714
          %vm732 = vcmp.eq.s32.totalorder %v461, %v718
          %vm733 = vcmp.eq.s32.totalorder %v462, %v714
          %vm734 = vcmp.eq.s32.totalorder %v462, %v718
          %vm735 = vcmp.eq.s32.totalorder %v463, %v714
          %vm736 = vcmp.eq.s32.totalorder %v463, %v718
          %vm737 = vcmp.eq.s32.totalorder %v464, %v714
          %vm738 = vcmp.eq.s32.totalorder %v464, %v718
          %vm739 = vcmp.eq.s32.totalorder %v465, %v714
          %vm740 = vcmp.eq.s32.totalorder %v465, %v718
          %vm741 = vcmp.eq.s32.totalorder %v466, %v714
          %vm742 = vcmp.eq.s32.totalorder %v466, %v718
          %vm743 = vcmp.eq.s32.totalorder %v467, %v714
          %vm744 = vcmp.eq.s32.totalorder %v467, %v718
          %vm745 = vcmp.eq.s32.totalorder %v468, %v714
          %vm746 = vcmp.eq.s32.totalorder %v468, %v718
          %vm747 = vcmp.eq.s32.totalorder %v469, %v714
          %vm748 = vcmp.eq.s32.totalorder %v469, %v718
          %vm749 = vcmp.eq.s32.totalorder %v470, %v714
          %vm750 = vcmp.eq.s32.totalorder %v470, %v718
          %v751 = vsel %vm719, 1, 0
          %v752 = vsel %vm720, 1, 0
          %v753 = vsel %vm721, 1, 0
          %v754 = vsel %vm722, 1, 0
          %v755 = vsel %vm723, 1, 0
          %v756 = vsel %vm724, 1, 0
          %v757 = vsel %vm725, 1, 0
          %v758 = vsel %vm726, 1, 0
          %v759 = vsel %vm727, 1, 0
          %v760 = vsel %vm728, 1, 0
          %v761 = vsel %vm729, 1, 0
          %v762 = vsel %vm730, 1, 0
          %v763 = vsel %vm731, 1, 0
          %v764 = vsel %vm732, 1, 0
          %v765 = vsel %vm733, 1, 0
          %v766 = vsel %vm734, 1, 0
          %v767 = vsel %vm735, 1, 0
          %v768 = vsel %vm736, 1, 0
          %v769 = vsel %vm737, 1, 0
          %v770 = vsel %vm738, 1, 0
          %v771 = vsel %vm739, 1, 0
          %v772 = vsel %vm740, 1, 0
          %v773 = vsel %vm741, 1, 0
          %v774 = vsel %vm742, 1, 0
          %v775 = vsel %vm743, 1, 0
          %v776 = vsel %vm744, 1, 0
          %v777 = vsel %vm745, 1, 0
          %v778 = vsel %vm746, 1, 0
          %v779 = vsel %vm747, 1, 0
          %v780 = vsel %vm748, 1, 0
          %v781 = vsel %vm749, 1, 0
          %v782 = vsel %vm750, 1, 0
          %v783 = vcvt.s32.f32 %v751
          %v784 = vcvt.s32.f32 %v752
          %v785 = vcvt.s32.f32 %v753
          %v786 = vcvt.s32.f32 %v754
          %v787 = vcvt.s32.f32 %v755
          %v788 = vcvt.s32.f32 %v756
          %v789 = vcvt.s32.f32 %v757
          %v790 = vcvt.s32.f32 %v758
          %v791 = vcvt.s32.f32 %v759
          %v792 = vcvt.s32.f32 %v760
          %v793 = vcvt.s32.f32 %v761
          %v794 = vcvt.s32.f32 %v762
          %v795 = vcvt.s32.f32 %v763
          %v796 = vcvt.s32.f32 %v764
          %v797 = vcvt.s32.f32 %v765
          %v798 = vcvt.s32.f32 %v766
          %v799 = vcvt.s32.f32 %v767
          %v800 = vcvt.s32.f32 %v768
          %v801 = vcvt.s32.f32 %v769
          %v802 = vcvt.s32.f32 %v770
          %v803 = vcvt.s32.f32 %v771
          %v804 = vcvt.s32.f32 %v772
          %v805 = vcvt.s32.f32 %v773
          %v806 = vcvt.s32.f32 %v774
          %v807 = vcvt.s32.f32 %v775
          %v808 = vcvt.s32.f32 %v776
          %v809 = vcvt.s32.f32 %v777
          %v810 = vcvt.s32.f32 %v778
          %v811 = vcvt.s32.f32 %v779
          %v812 = vcvt.s32.f32 %v780
          %v813 = vcvt.s32.f32 %v781
          %v814 = vcvt.s32.f32 %v782
          %v815 = vadd.f32 %v679, %v783
          %v816 = vadd.f32 %v680, %v784
          %v817 = vadd.f32 %v681, %v785
          %v818 = vadd.f32 %v682, %v786
          %v819 = vadd.f32 %v683, %v787
          %v820 = vadd.f32 %v684, %v788
          %v821 = vadd.f32 %v685, %v789
          %v822 = vadd.f32 %v686, %v790
          %v823 = vadd.f32 %v687, %v791
          %v824 = vadd.f32 %v688, %v792
          %v825 = vadd.f32 %v689, %v793
          %v826 = vadd.f32 %v690, %v794
          %v827 = vadd.f32 %v691, %v795
          %v828 = vadd.f32 %v692, %v796
          %v829 = vadd.f32 %v693, %v797
          %v830 = vadd.f32 %v694, %v798
          %v831 = vadd.f32 %v695, %v799
          %v832 = vadd.f32 %v696, %v800
          %v833 = vadd.f32 %v697, %v801
          %v834 = vadd.f32 %v698, %v802
          %v835 = vadd.f32 %v699, %v803
          %v836 = vadd.f32 %v700, %v804
          %v837 = vadd.f32 %v701, %v805
          %v838 = vadd.f32 %v702, %v806
          %v839 = vadd.f32 %v703, %v807
          %v840 = vadd.f32 %v704, %v808
          %v841 = vadd.f32 %v705, %v809
          %v842 = vadd.f32 %v706, %v810
          %v843 = vadd.f32 %v707, %v811
          %v844 = vadd.f32 %v708, %v812
          %v845 = vadd.f32 %v709, %v813
          %v846 = vadd.f32 %v710, %v814
          %v847 = vlaneseq
          %v848 = vshrl.u32 %v847, 7
          %v849 = vsub.s32 3, %v848
          %v850 = vrot.slane %v430, %v849
          %v851 = vlaneseq
          %v852 = vshrl.u32 %v851, 7
          %v853 = vsub.s32 3, %v852
          %v854 = vrot.slane %v431, %v853
          %vm855 = vcmp.eq.s32.totalorder %v455, %v850
          %vm856 = vcmp.eq.s32.totalorder %v455, %v854
          %vm857 = vcmp.eq.s32.totalorder %v456, %v850
          %vm858 = vcmp.eq.s32.totalorder %v456, %v854
          %vm859 = vcmp.eq.s32.totalorder %v457, %v850
          %vm860 = vcmp.eq.s32.totalorder %v457, %v854
          %vm861 = vcmp.eq.s32.totalorder %v458, %v850
          %vm862 = vcmp.eq.s32.totalorder %v458, %v854
          %vm863 = vcmp.eq.s32.totalorder %v459, %v850
          %vm864 = vcmp.eq.s32.totalorder %v459, %v854
          %vm865 = vcmp.eq.s32.totalorder %v460, %v850
          %vm866 = vcmp.eq.s32.totalorder %v460, %v854
          %vm867 = vcmp.eq.s32.totalorder %v461, %v850
          %vm868 = vcmp.eq.s32.totalorder %v461, %v854
          %vm869 = vcmp.eq.s32.totalorder %v462, %v850
          %vm870 = vcmp.eq.s32.totalorder %v462, %v854
          %vm871 = vcmp.eq.s32.totalorder %v463, %v850
          %vm872 = vcmp.eq.s32.totalorder %v463, %v854
          %vm873 = vcmp.eq.s32.totalorder %v464, %v850
          %vm874 = vcmp.eq.s32.totalorder %v464, %v854
          %vm875 = vcmp.eq.s32.totalorder %v465, %v850
          %vm876 = vcmp.eq.s32.totalorder %v465, %v854
          %vm877 = vcmp.eq.s32.totalorder %v466, %v850
          %vm878 = vcmp.eq.s32.totalorder %v466, %v854
          %vm879 = vcmp.eq.s32.totalorder %v467, %v850
          %vm880 = vcmp.eq.s32.totalorder %v467, %v854
          %vm881 = vcmp.eq.s32.totalorder %v468, %v850
          %vm882 = vcmp.eq.s32.totalorder %v468, %v854
          %vm883 = vcmp.eq.s32.totalorder %v469, %v850
          %vm884 = vcmp.eq.s32.totalorder %v469, %v854
          %vm885 = vcmp.eq.s32.totalorder %v470, %v850
          %vm886 = vcmp.eq.s32.totalorder %v470, %v854
          %v887 = vsel %vm855, 1, 0
          %v888 = vsel %vm856, 1, 0
          %v889 = vsel %vm857, 1, 0
          %v890 = vsel %vm858, 1, 0
          %v891 = vsel %vm859, 1, 0
          %v892 = vsel %vm860, 1, 0
          %v893 = vsel %vm861, 1, 0
          %v894 = vsel %vm862, 1, 0
          %v895 = vsel %vm863, 1, 0
          %v896 = vsel %vm864, 1, 0
          %v897 = vsel %vm865, 1, 0
          %v898 = vsel %vm866, 1, 0
          %v899 = vsel %vm867, 1, 0
          %v900 = vsel %vm868, 1, 0
          %v901 = vsel %vm869, 1, 0
          %v902 = vsel %vm870, 1, 0
          %v903 = vsel %vm871, 1, 0
          %v904 = vsel %vm872, 1, 0
          %v905 = vsel %vm873, 1, 0
          %v906 = vsel %vm874, 1, 0
          %v907 = vsel %vm875, 1, 0
          %v908 = vsel %vm876, 1, 0
          %v909 = vsel %vm877, 1, 0
          %v910 = vsel %vm878, 1, 0
          %v911 = vsel %vm879, 1, 0
          %v912 = vsel %vm880, 1, 0
          %v913 = vsel %vm881, 1, 0
          %v914 = vsel %vm882, 1, 0
          %v915 = vsel %vm883, 1, 0
          %v916 = vsel %vm884, 1, 0
          %v917 = vsel %vm885, 1, 0
          %v918 = vsel %vm886, 1, 0
          %v919 = vcvt.s32.f32 %v887
          %v920 = vcvt.s32.f32 %v888
          %v921 = vcvt.s32.f32 %v889
          %v922 = vcvt.s32.f32 %v890
          %v923 = vcvt.s32.f32 %v891
          %v924 = vcvt.s32.f32 %v892
          %v925 = vcvt.s32.f32 %v893
          %v926 = vcvt.s32.f32 %v894
          %v927 = vcvt.s32.f32 %v895
          %v928 = vcvt.s32.f32 %v896
          %v929 = vcvt.s32.f32 %v897
          %v930 = vcvt.s32.f32 %v898
          %v931 = vcvt.s32.f32 %v899
          %v932 = vcvt.s32.f32 %v900
          %v933 = vcvt.s32.f32 %v901
          %v934 = vcvt.s32.f32 %v902
          %v935 = vcvt.s32.f32 %v903
          %v936 = vcvt.s32.f32 %v904
          %v937 = vcvt.s32.f32 %v905
          %v938 = vcvt.s32.f32 %v906
          %v939 = vcvt.s32.f32 %v907
          %v940 = vcvt.s32.f32 %v908
          %v941 = vcvt.s32.f32 %v909
          %v942 = vcvt.s32.f32 %v910
          %v943 = vcvt.s32.f32 %v911
          %v944 = vcvt.s32.f32 %v912
          %v945 = vcvt.s32.f32 %v913
          %v946 = vcvt.s32.f32 %v914
          %v947 = vcvt.s32.f32 %v915
          %v948 = vcvt.s32.f32 %v916
          %v949 = vcvt.s32.f32 %v917
          %v950 = vcvt.s32.f32 %v918
          %v951 = vadd.f32 %v815, %v919
          %v952 = vadd.f32 %v816, %v920
          %v953 = vadd.f32 %v817, %v921
          %v954 = vadd.f32 %v818, %v922
          %v955 = vadd.f32 %v819, %v923
          %v956 = vadd.f32 %v820, %v924
          %v957 = vadd.f32 %v821, %v925
          %v958 = vadd.f32 %v822, %v926
          %v959 = vadd.f32 %v823, %v927
          %v960 = vadd.f32 %v824, %v928
          %v961 = vadd.f32 %v825, %v929
          %v962 = vadd.f32 %v826, %v930
          %v963 = vadd.f32 %v827, %v931
          %v964 = vadd.f32 %v828, %v932
          %v965 = vadd.f32 %v829, %v933
          %v966 = vadd.f32 %v830, %v934
          %v967 = vadd.f32 %v831, %v935
          %v968 = vadd.f32 %v832, %v936
          %v969 = vadd.f32 %v833, %v937
          %v970 = vadd.f32 %v834, %v938
          %v971 = vadd.f32 %v835, %v939
          %v972 = vadd.f32 %v836, %v940
          %v973 = vadd.f32 %v837, %v941
          %v974 = vadd.f32 %v838, %v942
          %v975 = vadd.f32 %v839, %v943
          %v976 = vadd.f32 %v840, %v944
          %v977 = vadd.f32 %v841, %v945
          %v978 = vadd.f32 %v842, %v946
          %v979 = vadd.f32 %v843, %v947
          %v980 = vadd.f32 %v844, %v948
          %v981 = vadd.f32 %v845, %v949
          %v982 = vadd.f32 %v846, %v950
          %v983 = vlaneseq
          %v984 = vshrl.u32 %v983, 7
          %v985 = vsub.s32 4, %v984
          %v986 = vrot.slane %v430, %v985
          %v987 = vlaneseq
          %v988 = vshrl.u32 %v987, 7
          %v989 = vsub.s32 4, %v988
          %v990 = vrot.slane %v431, %v989
          %vm991 = vcmp.eq.s32.totalorder %v455, %v986
          %vm992 = vcmp.eq.s32.totalorder %v455, %v990
          %vm993 = vcmp.eq.s32.totalorder %v456, %v986
          %vm994 = vcmp.eq.s32.totalorder %v456, %v990
          %vm995 = vcmp.eq.s32.totalorder %v457, %v986
          %vm996 = vcmp.eq.s32.totalorder %v457, %v990
          %vm997 = vcmp.eq.s32.totalorder %v458, %v986
          %vm998 = vcmp.eq.s32.totalorder %v458, %v990
          %vm999 = vcmp.eq.s32.totalorder %v459, %v986
          %vm1000 = vcmp.eq.s32.totalorder %v459, %v990
          %vm1001 = vcmp.eq.s32.totalorder %v460, %v986
          %vm1002 = vcmp.eq.s32.totalorder %v460, %v990
          %vm1003 = vcmp.eq.s32.totalorder %v461, %v986
          %vm1004 = vcmp.eq.s32.totalorder %v461, %v990
          %vm1005 = vcmp.eq.s32.totalorder %v462, %v986
          %vm1006 = vcmp.eq.s32.totalorder %v462, %v990
          %vm1007 = vcmp.eq.s32.totalorder %v463, %v986
          %vm1008 = vcmp.eq.s32.totalorder %v463, %v990
          %vm1009 = vcmp.eq.s32.totalorder %v464, %v986
          %vm1010 = vcmp.eq.s32.totalorder %v464, %v990
          %vm1011 = vcmp.eq.s32.totalorder %v465, %v986
          %vm1012 = vcmp.eq.s32.totalorder %v465, %v990
          %vm1013 = vcmp.eq.s32.totalorder %v466, %v986
          %vm1014 = vcmp.eq.s32.totalorder %v466, %v990
          %vm1015 = vcmp.eq.s32.totalorder %v467, %v986
          %vm1016 = vcmp.eq.s32.totalorder %v467, %v990
          %vm1017 = vcmp.eq.s32.totalorder %v468, %v986
          %vm1018 = vcmp.eq.s32.totalorder %v468, %v990
          %vm1019 = vcmp.eq.s32.totalorder %v469, %v986
          %vm1020 = vcmp.eq.s32.totalorder %v469, %v990
          %vm1021 = vcmp.eq.s32.totalorder %v470, %v986
          %vm1022 = vcmp.eq.s32.totalorder %v470, %v990
          %v1023 = vsel %vm991, 1, 0
          %v1024 = vsel %vm992, 1, 0
          %v1025 = vsel %vm993, 1, 0
          %v1026 = vsel %vm994, 1, 0
          %v1027 = vsel %vm995, 1, 0
          %v1028 = vsel %vm996, 1, 0
          %v1029 = vsel %vm997, 1, 0
          %v1030 = vsel %vm998, 1, 0
          %v1031 = vsel %vm999, 1, 0
          %v1032 = vsel %vm1000, 1, 0
          %v1033 = vsel %vm1001, 1, 0
          %v1034 = vsel %vm1002, 1, 0
          %v1035 = vsel %vm1003, 1, 0
          %v1036 = vsel %vm1004, 1, 0
          %v1037 = vsel %vm1005, 1, 0
          %v1038 = vsel %vm1006, 1, 0
          %v1039 = vsel %vm1007, 1, 0
          %v1040 = vsel %vm1008, 1, 0
          %v1041 = vsel %vm1009, 1, 0
          %v1042 = vsel %vm1010, 1, 0
          %v1043 = vsel %vm1011, 1, 0
          %v1044 = vsel %vm1012, 1, 0
          %v1045 = vsel %vm1013, 1, 0
          %v1046 = vsel %vm1014, 1, 0
          %v1047 = vsel %vm1015, 1, 0
          %v1048 = vsel %vm1016, 1, 0
          %v1049 = vsel %vm1017, 1, 0
          %v1050 = vsel %vm1018, 1, 0
          %v1051 = vsel %vm1019, 1, 0
          %v1052 = vsel %vm1020, 1, 0
          %v1053 = vsel %vm1021, 1, 0
          %v1054 = vsel %vm1022, 1, 0
          %v1055 = vcvt.s32.f32 %v1023
          %v1056 = vcvt.s32.f32 %v1024
          %v1057 = vcvt.s32.f32 %v1025
          %v1058 = vcvt.s32.f32 %v1026
          %v1059 = vcvt.s32.f32 %v1027
          %v1060 = vcvt.s32.f32 %v1028
          %v1061 = vcvt.s32.f32 %v1029
          %v1062 = vcvt.s32.f32 %v1030
          %v1063 = vcvt.s32.f32 %v1031
          %v1064 = vcvt.s32.f32 %v1032
          %v1065 = vcvt.s32.f32 %v1033
          %v1066 = vcvt.s32.f32 %v1034
          %v1067 = vcvt.s32.f32 %v1035
          %v1068 = vcvt.s32.f32 %v1036
          %v1069 = vcvt.s32.f32 %v1037
          %v1070 = vcvt.s32.f32 %v1038
          %v1071 = vcvt.s32.f32 %v1039
          %v1072 = vcvt.s32.f32 %v1040
          %v1073 = vcvt.s32.f32 %v1041
          %v1074 = vcvt.s32.f32 %v1042
          %v1075 = vcvt.s32.f32 %v1043
          %v1076 = vcvt.s32.f32 %v1044
          %v1077 = vcvt.s32.f32 %v1045
          %v1078 = vcvt.s32.f32 %v1046
          %v1079 = vcvt.s32.f32 %v1047
          %v1080 = vcvt.s32.f32 %v1048
          %v1081 = vcvt.s32.f32 %v1049
          %v1082 = vcvt.s32.f32 %v1050
          %v1083 = vcvt.s32.f32 %v1051
          %v1084 = vcvt.s32.f32 %v1052
          %v1085 = vcvt.s32.f32 %v1053
          %v1086 = vcvt.s32.f32 %v1054
          %v1087 = vadd.f32 %v951, %v1055
          %v1088 = vadd.f32 %v952, %v1056
          %v1089 = vadd.f32 %v953, %v1057
          %v1090 = vadd.f32 %v954, %v1058
          %v1091 = vadd.f32 %v955, %v1059
          %v1092 = vadd.f32 %v956, %v1060
          %v1093 = vadd.f32 %v957, %v1061
          %v1094 = vadd.f32 %v958, %v1062
          %v1095 = vadd.f32 %v959, %v1063
          %v1096 = vadd.f32 %v960, %v1064
          %v1097 = vadd.f32 %v961, %v1065
          %v1098 = vadd.f32 %v962, %v1066
          %v1099 = vadd.f32 %v963, %v1067
          %v1100 = vadd.f32 %v964, %v1068
          %v1101 = vadd.f32 %v965, %v1069
          %v1102 = vadd.f32 %v966, %v1070
          %v1103 = vadd.f32 %v967, %v1071
          %v1104 = vadd.f32 %v968, %v1072
          %v1105 = vadd.f32 %v969, %v1073
          %v1106 = vadd.f32 %v970, %v1074
          %v1107 = vadd.f32 %v971, %v1075
          %v1108 = vadd.f32 %v972, %v1076
          %v1109 = vadd.f32 %v973, %v1077
          %v1110 = vadd.f32 %v974, %v1078
          %v1111 = vadd.f32 %v975, %v1079
          %v1112 = vadd.f32 %v976, %v1080
          %v1113 = vadd.f32 %v977, %v1081
          %v1114 = vadd.f32 %v978, %v1082
          %v1115 = vadd.f32 %v979, %v1083
          %v1116 = vadd.f32 %v980, %v1084
          %v1117 = vadd.f32 %v981, %v1085
          %v1118 = vadd.f32 %v982, %v1086
          %v1119 = vlaneseq
          %v1120 = vshrl.u32 %v1119, 7
          %v1121 = vsub.s32 5, %v1120
          %v1122 = vrot.slane %v430, %v1121
          %v1123 = vlaneseq
          %v1124 = vshrl.u32 %v1123, 7
          %v1125 = vsub.s32 5, %v1124
          %v1126 = vrot.slane %v431, %v1125
          %vm1127 = vcmp.eq.s32.totalorder %v455, %v1122
          %vm1128 = vcmp.eq.s32.totalorder %v455, %v1126
          %vm1129 = vcmp.eq.s32.totalorder %v456, %v1122
          %vm1130 = vcmp.eq.s32.totalorder %v456, %v1126
          %vm1131 = vcmp.eq.s32.totalorder %v457, %v1122
          %vm1132 = vcmp.eq.s32.totalorder %v457, %v1126
          %vm1133 = vcmp.eq.s32.totalorder %v458, %v1122
          %vm1134 = vcmp.eq.s32.totalorder %v458, %v1126
          %vm1135 = vcmp.eq.s32.totalorder %v459, %v1122
          %vm1136 = vcmp.eq.s32.totalorder %v459, %v1126
          %vm1137 = vcmp.eq.s32.totalorder %v460, %v1122
          %vm1138 = vcmp.eq.s32.totalorder %v460, %v1126
          %vm1139 = vcmp.eq.s32.totalorder %v461, %v1122
          %vm1140 = vcmp.eq.s32.totalorder %v461, %v1126
          %vm1141 = vcmp.eq.s32.totalorder %v462, %v1122
          %vm1142 = vcmp.eq.s32.totalorder %v462, %v1126
          %vm1143 = vcmp.eq.s32.totalorder %v463, %v1122
          %vm1144 = vcmp.eq.s32.totalorder %v463, %v1126
          %vm1145 = vcmp.eq.s32.totalorder %v464, %v1122
          %vm1146 = vcmp.eq.s32.totalorder %v464, %v1126
          %vm1147 = vcmp.eq.s32.totalorder %v465, %v1122
          %vm1148 = vcmp.eq.s32.totalorder %v465, %v1126
          %vm1149 = vcmp.eq.s32.totalorder %v466, %v1122
          %vm1150 = vcmp.eq.s32.totalorder %v466, %v1126
          %vm1151 = vcmp.eq.s32.totalorder %v467, %v1122
          %vm1152 = vcmp.eq.s32.totalorder %v467, %v1126
          %vm1153 = vcmp.eq.s32.totalorder %v468, %v1122
          %vm1154 = vcmp.eq.s32.totalorder %v468, %v1126
          %vm1155 = vcmp.eq.s32.totalorder %v469, %v1122
          %vm1156 = vcmp.eq.s32.totalorder %v469, %v1126
          %vm1157 = vcmp.eq.s32.totalorder %v470, %v1122
          %vm1158 = vcmp.eq.s32.totalorder %v470, %v1126
          %v1159 = vsel %vm1127, 1, 0
          %v1160 = vsel %vm1128, 1, 0
          %v1161 = vsel %vm1129, 1, 0
          %v1162 = vsel %vm1130, 1, 0
          %v1163 = vsel %vm1131, 1, 0
          %v1164 = vsel %vm1132, 1, 0
          %v1165 = vsel %vm1133, 1, 0
          %v1166 = vsel %vm1134, 1, 0
          %v1167 = vsel %vm1135, 1, 0
          %v1168 = vsel %vm1136, 1, 0
          %v1169 = vsel %vm1137, 1, 0
          %v1170 = vsel %vm1138, 1, 0
          %v1171 = vsel %vm1139, 1, 0
          %v1172 = vsel %vm1140, 1, 0
          %v1173 = vsel %vm1141, 1, 0
          %v1174 = vsel %vm1142, 1, 0
          %v1175 = vsel %vm1143, 1, 0
          %v1176 = vsel %vm1144, 1, 0
          %v1177 = vsel %vm1145, 1, 0
          %v1178 = vsel %vm1146, 1, 0
          %v1179 = vsel %vm1147, 1, 0
          %v1180 = vsel %vm1148, 1, 0
          %v1181 = vsel %vm1149, 1, 0
          %v1182 = vsel %vm1150, 1, 0
          %v1183 = vsel %vm1151, 1, 0
          %v1184 = vsel %vm1152, 1, 0
          %v1185 = vsel %vm1153, 1, 0
          %v1186 = vsel %vm1154, 1, 0
          %v1187 = vsel %vm1155, 1, 0
          %v1188 = vsel %vm1156, 1, 0
          %v1189 = vsel %vm1157, 1, 0
          %v1190 = vsel %vm1158, 1, 0
          %v1191 = vcvt.s32.f32 %v1159
          %v1192 = vcvt.s32.f32 %v1160
          %v1193 = vcvt.s32.f32 %v1161
          %v1194 = vcvt.s32.f32 %v1162
          %v1195 = vcvt.s32.f32 %v1163
          %v1196 = vcvt.s32.f32 %v1164
          %v1197 = vcvt.s32.f32 %v1165
          %v1198 = vcvt.s32.f32 %v1166
          %v1199 = vcvt.s32.f32 %v1167
          %v1200 = vcvt.s32.f32 %v1168
          %v1201 = vcvt.s32.f32 %v1169
          %v1202 = vcvt.s32.f32 %v1170
          %v1203 = vcvt.s32.f32 %v1171
          %v1204 = vcvt.s32.f32 %v1172
          %v1205 = vcvt.s32.f32 %v1173
          %v1206 = vcvt.s32.f32 %v1174
          %v1207 = vcvt.s32.f32 %v1175
          %v1208 = vcvt.s32.f32 %v1176
          %v1209 = vcvt.s32.f32 %v1177
          %v1210 = vcvt.s32.f32 %v1178
          %v1211 = vcvt.s32.f32 %v1179
          %v1212 = vcvt.s32.f32 %v1180
          %v1213 = vcvt.s32.f32 %v1181
          %v1214 = vcvt.s32.f32 %v1182
          %v1215 = vcvt.s32.f32 %v1183
          %v1216 = vcvt.s32.f32 %v1184
          %v1217 = vcvt.s32.f32 %v1185
          %v1218 = vcvt.s32.f32 %v1186
          %v1219 = vcvt.s32.f32 %v1187
          %v1220 = vcvt.s32.f32 %v1188
          %v1221 = vcvt.s32.f32 %v1189
          %v1222 = vcvt.s32.f32 %v1190
          %v1223 = vadd.f32 %v1087, %v1191
          %v1224 = vadd.f32 %v1088, %v1192
          %v1225 = vadd.f32 %v1089, %v1193
          %v1226 = vadd.f32 %v1090, %v1194
          %v1227 = vadd.f32 %v1091, %v1195
          %v1228 = vadd.f32 %v1092, %v1196
          %v1229 = vadd.f32 %v1093, %v1197
          %v1230 = vadd.f32 %v1094, %v1198
          %v1231 = vadd.f32 %v1095, %v1199
          %v1232 = vadd.f32 %v1096, %v1200
          %v1233 = vadd.f32 %v1097, %v1201
          %v1234 = vadd.f32 %v1098, %v1202
          %v1235 = vadd.f32 %v1099, %v1203
          %v1236 = vadd.f32 %v1100, %v1204
          %v1237 = vadd.f32 %v1101, %v1205
          %v1238 = vadd.f32 %v1102, %v1206
          %v1239 = vadd.f32 %v1103, %v1207
          %v1240 = vadd.f32 %v1104, %v1208
          %v1241 = vadd.f32 %v1105, %v1209
          %v1242 = vadd.f32 %v1106, %v1210
          %v1243 = vadd.f32 %v1107, %v1211
          %v1244 = vadd.f32 %v1108, %v1212
          %v1245 = vadd.f32 %v1109, %v1213
          %v1246 = vadd.f32 %v1110, %v1214
          %v1247 = vadd.f32 %v1111, %v1215
          %v1248 = vadd.f32 %v1112, %v1216
          %v1249 = vadd.f32 %v1113, %v1217
          %v1250 = vadd.f32 %v1114, %v1218
          %v1251 = vadd.f32 %v1115, %v1219
          %v1252 = vadd.f32 %v1116, %v1220
          %v1253 = vadd.f32 %v1117, %v1221
          %v1254 = vadd.f32 %v1118, %v1222
          %v1255 = vlaneseq
          %v1256 = vshrl.u32 %v1255, 7
          %v1257 = vsub.s32 6, %v1256
          %v1258 = vrot.slane %v430, %v1257
          %v1259 = vlaneseq
          %v1260 = vshrl.u32 %v1259, 7
          %v1261 = vsub.s32 6, %v1260
          %v1262 = vrot.slane %v431, %v1261
          %vm1263 = vcmp.eq.s32.totalorder %v455, %v1258
          %vm1264 = vcmp.eq.s32.totalorder %v455, %v1262
          %vm1265 = vcmp.eq.s32.totalorder %v456, %v1258
          %vm1266 = vcmp.eq.s32.totalorder %v456, %v1262
          %vm1267 = vcmp.eq.s32.totalorder %v457, %v1258
          %vm1268 = vcmp.eq.s32.totalorder %v457, %v1262
          %vm1269 = vcmp.eq.s32.totalorder %v458, %v1258
          %vm1270 = vcmp.eq.s32.totalorder %v458, %v1262
          %vm1271 = vcmp.eq.s32.totalorder %v459, %v1258
          %vm1272 = vcmp.eq.s32.totalorder %v459, %v1262
          %vm1273 = vcmp.eq.s32.totalorder %v460, %v1258
          %vm1274 = vcmp.eq.s32.totalorder %v460, %v1262
          %vm1275 = vcmp.eq.s32.totalorder %v461, %v1258
          %vm1276 = vcmp.eq.s32.totalorder %v461, %v1262
          %vm1277 = vcmp.eq.s32.totalorder %v462, %v1258
          %vm1278 = vcmp.eq.s32.totalorder %v462, %v1262
          %vm1279 = vcmp.eq.s32.totalorder %v463, %v1258
          %vm1280 = vcmp.eq.s32.totalorder %v463, %v1262
          %vm1281 = vcmp.eq.s32.totalorder %v464, %v1258
          %vm1282 = vcmp.eq.s32.totalorder %v464, %v1262
          %vm1283 = vcmp.eq.s32.totalorder %v465, %v1258
          %vm1284 = vcmp.eq.s32.totalorder %v465, %v1262
          %vm1285 = vcmp.eq.s32.totalorder %v466, %v1258
          %vm1286 = vcmp.eq.s32.totalorder %v466, %v1262
          %vm1287 = vcmp.eq.s32.totalorder %v467, %v1258
          %vm1288 = vcmp.eq.s32.totalorder %v467, %v1262
          %vm1289 = vcmp.eq.s32.totalorder %v468, %v1258
          %vm1290 = vcmp.eq.s32.totalorder %v468, %v1262
          %vm1291 = vcmp.eq.s32.totalorder %v469, %v1258
          %vm1292 = vcmp.eq.s32.totalorder %v469, %v1262
          %vm1293 = vcmp.eq.s32.totalorder %v470, %v1258
          %vm1294 = vcmp.eq.s32.totalorder %v470, %v1262
          %v1295 = vsel %vm1263, 1, 0
          %v1296 = vsel %vm1264, 1, 0
          %v1297 = vsel %vm1265, 1, 0
          %v1298 = vsel %vm1266, 1, 0
          %v1299 = vsel %vm1267, 1, 0
          %v1300 = vsel %vm1268, 1, 0
          %v1301 = vsel %vm1269, 1, 0
          %v1302 = vsel %vm1270, 1, 0
          %v1303 = vsel %vm1271, 1, 0
          %v1304 = vsel %vm1272, 1, 0
          %v1305 = vsel %vm1273, 1, 0
          %v1306 = vsel %vm1274, 1, 0
          %v1307 = vsel %vm1275, 1, 0
          %v1308 = vsel %vm1276, 1, 0
          %v1309 = vsel %vm1277, 1, 0
          %v1310 = vsel %vm1278, 1, 0
          %v1311 = vsel %vm1279, 1, 0
          %v1312 = vsel %vm1280, 1, 0
          %v1313 = vsel %vm1281, 1, 0
          %v1314 = vsel %vm1282, 1, 0
          %v1315 = vsel %vm1283, 1, 0
          %v1316 = vsel %vm1284, 1, 0
          %v1317 = vsel %vm1285, 1, 0
          %v1318 = vsel %vm1286, 1, 0
          %v1319 = vsel %vm1287, 1, 0
          %v1320 = vsel %vm1288, 1, 0
          %v1321 = vsel %vm1289, 1, 0
          %v1322 = vsel %vm1290, 1, 0
          %v1323 = vsel %vm1291, 1, 0
          %v1324 = vsel %vm1292, 1, 0
          %v1325 = vsel %vm1293, 1, 0
          %v1326 = vsel %vm1294, 1, 0
          %v1327 = vcvt.s32.f32 %v1295
          %v1328 = vcvt.s32.f32 %v1296
          %v1329 = vcvt.s32.f32 %v1297
          %v1330 = vcvt.s32.f32 %v1298
          %v1331 = vcvt.s32.f32 %v1299
          %v1332 = vcvt.s32.f32 %v1300
          %v1333 = vcvt.s32.f32 %v1301
          %v1334 = vcvt.s32.f32 %v1302
          %v1335 = vcvt.s32.f32 %v1303
          %v1336 = vcvt.s32.f32 %v1304
          %v1337 = vcvt.s32.f32 %v1305
          %v1338 = vcvt.s32.f32 %v1306
          %v1339 = vcvt.s32.f32 %v1307
          %v1340 = vcvt.s32.f32 %v1308
          %v1341 = vcvt.s32.f32 %v1309
          %v1342 = vcvt.s32.f32 %v1310
          %v1343 = vcvt.s32.f32 %v1311
          %v1344 = vcvt.s32.f32 %v1312
          %v1345 = vcvt.s32.f32 %v1313
          %v1346 = vcvt.s32.f32 %v1314
          %v1347 = vcvt.s32.f32 %v1315
          %v1348 = vcvt.s32.f32 %v1316
          %v1349 = vcvt.s32.f32 %v1317
          %v1350 = vcvt.s32.f32 %v1318
          %v1351 = vcvt.s32.f32 %v1319
          %v1352 = vcvt.s32.f32 %v1320
          %v1353 = vcvt.s32.f32 %v1321
          %v1354 = vcvt.s32.f32 %v1322
          %v1355 = vcvt.s32.f32 %v1323
          %v1356 = vcvt.s32.f32 %v1324
          %v1357 = vcvt.s32.f32 %v1325
          %v1358 = vcvt.s32.f32 %v1326
          %v1359 = vadd.f32 %v1223, %v1327
          %v1360 = vadd.f32 %v1224, %v1328
          %v1361 = vadd.f32 %v1225, %v1329
          %v1362 = vadd.f32 %v1226, %v1330
          %v1363 = vadd.f32 %v1227, %v1331
          %v1364 = vadd.f32 %v1228, %v1332
          %v1365 = vadd.f32 %v1229, %v1333
          %v1366 = vadd.f32 %v1230, %v1334
          %v1367 = vadd.f32 %v1231, %v1335
          %v1368 = vadd.f32 %v1232, %v1336
          %v1369 = vadd.f32 %v1233, %v1337
          %v1370 = vadd.f32 %v1234, %v1338
          %v1371 = vadd.f32 %v1235, %v1339
          %v1372 = vadd.f32 %v1236, %v1340
          %v1373 = vadd.f32 %v1237, %v1341
          %v1374 = vadd.f32 %v1238, %v1342
          %v1375 = vadd.f32 %v1239, %v1343
          %v1376 = vadd.f32 %v1240, %v1344
          %v1377 = vadd.f32 %v1241, %v1345
          %v1378 = vadd.f32 %v1242, %v1346
          %v1379 = vadd.f32 %v1243, %v1347
          %v1380 = vadd.f32 %v1244, %v1348
          %v1381 = vadd.f32 %v1245, %v1349
          %v1382 = vadd.f32 %v1246, %v1350
          %v1383 = vadd.f32 %v1247, %v1351
          %v1384 = vadd.f32 %v1248, %v1352
          %v1385 = vadd.f32 %v1249, %v1353
          %v1386 = vadd.f32 %v1250, %v1354
          %v1387 = vadd.f32 %v1251, %v1355
          %v1388 = vadd.f32 %v1252, %v1356
          %v1389 = vadd.f32 %v1253, %v1357
          %v1390 = vadd.f32 %v1254, %v1358
          %v1391 = vlaneseq
          %v1392 = vshrl.u32 %v1391, 7
          %v1393 = vsub.s32 7, %v1392
          %v1394 = vrot.slane %v430, %v1393
          %v1395 = vlaneseq
          %v1396 = vshrl.u32 %v1395, 7
          %v1397 = vsub.s32 7, %v1396
          %v1398 = vrot.slane %v431, %v1397
          %vm1399 = vcmp.eq.s32.totalorder %v455, %v1394
          %vm1400 = vcmp.eq.s32.totalorder %v455, %v1398
          %vm1401 = vcmp.eq.s32.totalorder %v456, %v1394
          %vm1402 = vcmp.eq.s32.totalorder %v456, %v1398
          %vm1403 = vcmp.eq.s32.totalorder %v457, %v1394
          %vm1404 = vcmp.eq.s32.totalorder %v457, %v1398
          %vm1405 = vcmp.eq.s32.totalorder %v458, %v1394
          %vm1406 = vcmp.eq.s32.totalorder %v458, %v1398
          %vm1407 = vcmp.eq.s32.totalorder %v459, %v1394
          %vm1408 = vcmp.eq.s32.totalorder %v459, %v1398
          %vm1409 = vcmp.eq.s32.totalorder %v460, %v1394
          %vm1410 = vcmp.eq.s32.totalorder %v460, %v1398
          %vm1411 = vcmp.eq.s32.totalorder %v461, %v1394
          %vm1412 = vcmp.eq.s32.totalorder %v461, %v1398
          %vm1413 = vcmp.eq.s32.totalorder %v462, %v1394
          %vm1414 = vcmp.eq.s32.totalorder %v462, %v1398
          %vm1415 = vcmp.eq.s32.totalorder %v463, %v1394
          %vm1416 = vcmp.eq.s32.totalorder %v463, %v1398
          %vm1417 = vcmp.eq.s32.totalorder %v464, %v1394
          %vm1418 = vcmp.eq.s32.totalorder %v464, %v1398
          %vm1419 = vcmp.eq.s32.totalorder %v465, %v1394
          %vm1420 = vcmp.eq.s32.totalorder %v465, %v1398
          %vm1421 = vcmp.eq.s32.totalorder %v466, %v1394
          %vm1422 = vcmp.eq.s32.totalorder %v466, %v1398
          %vm1423 = vcmp.eq.s32.totalorder %v467, %v1394
          %vm1424 = vcmp.eq.s32.totalorder %v467, %v1398
          %vm1425 = vcmp.eq.s32.totalorder %v468, %v1394
          %vm1426 = vcmp.eq.s32.totalorder %v468, %v1398
          %vm1427 = vcmp.eq.s32.totalorder %v469, %v1394
          %vm1428 = vcmp.eq.s32.totalorder %v469, %v1398
          %vm1429 = vcmp.eq.s32.totalorder %v470, %v1394
          %vm1430 = vcmp.eq.s32.totalorder %v470, %v1398
          %v1431 = vsel %vm1399, 1, 0
          %v1432 = vsel %vm1400, 1, 0
          %v1433 = vsel %vm1401, 1, 0
          %v1434 = vsel %vm1402, 1, 0
          %v1435 = vsel %vm1403, 1, 0
          %v1436 = vsel %vm1404, 1, 0
          %v1437 = vsel %vm1405, 1, 0
          %v1438 = vsel %vm1406, 1, 0
          %v1439 = vsel %vm1407, 1, 0
          %v1440 = vsel %vm1408, 1, 0
          %v1441 = vsel %vm1409, 1, 0
          %v1442 = vsel %vm1410, 1, 0
          %v1443 = vsel %vm1411, 1, 0
          %v1444 = vsel %vm1412, 1, 0
          %v1445 = vsel %vm1413, 1, 0
          %v1446 = vsel %vm1414, 1, 0
          %v1447 = vsel %vm1415, 1, 0
          %v1448 = vsel %vm1416, 1, 0
          %v1449 = vsel %vm1417, 1, 0
          %v1450 = vsel %vm1418, 1, 0
          %v1451 = vsel %vm1419, 1, 0
          %v1452 = vsel %vm1420, 1, 0
          %v1453 = vsel %vm1421, 1, 0
          %v1454 = vsel %vm1422, 1, 0
          %v1455 = vsel %vm1423, 1, 0
          %v1456 = vsel %vm1424, 1, 0
          %v1457 = vsel %vm1425, 1, 0
          %v1458 = vsel %vm1426, 1, 0
          %v1459 = vsel %vm1427, 1, 0
          %v1460 = vsel %vm1428, 1, 0
          %v1461 = vsel %vm1429, 1, 0
          %v1462 = vsel %vm1430, 1, 0
          %v1463 = vcvt.s32.f32 %v1431
          %v1464 = vcvt.s32.f32 %v1432
          %v1465 = vcvt.s32.f32 %v1433
          %v1466 = vcvt.s32.f32 %v1434
          %v1467 = vcvt.s32.f32 %v1435
          %v1468 = vcvt.s32.f32 %v1436
          %v1469 = vcvt.s32.f32 %v1437
          %v1470 = vcvt.s32.f32 %v1438
          %v1471 = vcvt.s32.f32 %v1439
          %v1472 = vcvt.s32.f32 %v1440
          %v1473 = vcvt.s32.f32 %v1441
          %v1474 = vcvt.s32.f32 %v1442
          %v1475 = vcvt.s32.f32 %v1443
          %v1476 = vcvt.s32.f32 %v1444
          %v1477 = vcvt.s32.f32 %v1445
          %v1478 = vcvt.s32.f32 %v1446
          %v1479 = vcvt.s32.f32 %v1447
          %v1480 = vcvt.s32.f32 %v1448
          %v1481 = vcvt.s32.f32 %v1449
          %v1482 = vcvt.s32.f32 %v1450
          %v1483 = vcvt.s32.f32 %v1451
          %v1484 = vcvt.s32.f32 %v1452
          %v1485 = vcvt.s32.f32 %v1453
          %v1486 = vcvt.s32.f32 %v1454
          %v1487 = vcvt.s32.f32 %v1455
          %v1488 = vcvt.s32.f32 %v1456
          %v1489 = vcvt.s32.f32 %v1457
          %v1490 = vcvt.s32.f32 %v1458
          %v1491 = vcvt.s32.f32 %v1459
          %v1492 = vcvt.s32.f32 %v1460
          %v1493 = vcvt.s32.f32 %v1461
          %v1494 = vcvt.s32.f32 %v1462
          %v1495 = vadd.f32 %v1359, %v1463
          %v1496 = vadd.f32 %v1360, %v1464
          %v1497 = vadd.f32 %v1361, %v1465
          %v1498 = vadd.f32 %v1362, %v1466
          %v1499 = vadd.f32 %v1363, %v1467
          %v1500 = vadd.f32 %v1364, %v1468
          %v1501 = vadd.f32 %v1365, %v1469
          %v1502 = vadd.f32 %v1366, %v1470
          %v1503 = vadd.f32 %v1367, %v1471
          %v1504 = vadd.f32 %v1368, %v1472
          %v1505 = vadd.f32 %v1369, %v1473
          %v1506 = vadd.f32 %v1370, %v1474
          %v1507 = vadd.f32 %v1371, %v1475
          %v1508 = vadd.f32 %v1372, %v1476
          %v1509 = vadd.f32 %v1373, %v1477
          %v1510 = vadd.f32 %v1374, %v1478
          %v1511 = vadd.f32 %v1375, %v1479
          %v1512 = vadd.f32 %v1376, %v1480
          %v1513 = vadd.f32 %v1377, %v1481
          %v1514 = vadd.f32 %v1378, %v1482
          %v1515 = vadd.f32 %v1379, %v1483
          %v1516 = vadd.f32 %v1380, %v1484
          %v1517 = vadd.f32 %v1381, %v1485
          %v1518 = vadd.f32 %v1382, %v1486
          %v1519 = vadd.f32 %v1383, %v1487
          %v1520 = vadd.f32 %v1384, %v1488
          %v1521 = vadd.f32 %v1385, %v1489
          %v1522 = vadd.f32 %v1386, %v1490
          %v1523 = vadd.f32 %v1387, %v1491
          %v1524 = vadd.f32 %v1388, %v1492
          %v1525 = vadd.f32 %v1389, %v1493
          %v1526 = vadd.f32 %v1390, %v1494
          %v1527 = vld [vmem:[#allocation2] sm:$0xff]
          %v1528 = vld [vmem:[#allocation2 + $0x8] sm:$0xff]
          %v1529 = vld [vmem:[#allocation2 + $0x10] sm:$0xff]
          %v1530 = vld [vmem:[#allocation2 + $0x18] sm:$0xff]
          %v1531 = vld [vmem:[%s361] sm:$0xf]
          %v1532 = vld [vmem:[%s361 + $0x4] sm:$0xf]
          %v1533 = vpack.c.bf16 %v1497, %v1495
          %v1534 = vpack.c.bf16 %v1498, %v1496
          %v1535 = vpack.c.bf16 %v1501, %v1499
          %v1536 = vpack.c.bf16 %v1502, %v1500
          %v1537 = vpack.c.bf16 %v1505, %v1503
          %v1538 = vpack.c.bf16 %v1506, %v1504
          %v1539 = vpack.c.bf16 %v1509, %v1507
          %v1540 = vpack.c.bf16 %v1510, %v1508
          %v1541 = vpack.c.bf16 %v1513, %v1511
          %v1542 = vpack.c.bf16 %v1514, %v1512
          %v1543 = vpack.c.bf16 %v1517, %v1515
          %v1544 = vpack.c.bf16 %v1518, %v1516
          %v1545 = vpack.c.bf16 %v1521, %v1519
          %v1546 = vpack.c.bf16 %v1522, %v1520
          %v1547 = vpack.c.bf16 %v1525, %v1523
          %v1548 = vpack.c.bf16 %v1526, %v1524
          %v1551 = vunpack.c.l.b16 %v1531
          %v1552 = vunpack.c.l.b16 %v1532
          %v1553 = vpack.c.b16 %v1552, %v1551
          %1555 = vmatprep.subr.bf16.mxu0 %v1534
          %1556 = vmatpush1.bf16.msra.mxu0 %v1533
          %1557 = vmatprep.subr.bf16.mxu0 %v1536
          %1558 = vmatpush1.bf16.msra.mxu0 %v1535
          %1559 = vmatprep.subr.bf16.mxu0 %v1538
          %1560 = vmatpush1.bf16.msra.mxu0 %v1537
          %1561 = vmatprep.subr.bf16.mxu0 %v1540
          %1562 = vmatpush1.bf16.msra.mxu0 %v1539
          %1563 = vmatprep.subr.bf16.mxu0 %v1542
          %1564 = vmatpush1.bf16.msra.mxu0 %v1541
          %1565 = vmatprep.subr.bf16.mxu0 %v1544
          %1566 = vmatpush1.bf16.msra.mxu0 %v1543
          %1567 = vmatprep.subr.bf16.mxu0 %v1546
          %1568 = vmatpush1.bf16.msra.mxu0 %v1545
          %1569 = vmatprep.subr.bf16.mxu0 %v1548
          %1570 = vmatpush1.bf16.msra.mxu0 %v1547
          %1571 = vmatprep.subr.bf16.mxu0 0
          %1572 = vmatpush1.bf16.msra.mxu0 0
          %1573 = vmatprep.subr.bf16.mxu0 0
          %1574 = vmatpush1.bf16.msra.mxu0 0
          %1575 = vmatprep.subr.bf16.mxu0 0
          %1576 = vmatpush1.bf16.msra.mxu0 0
          %1577 = vmatprep.subr.bf16.mxu0 0
          %1578 = vmatpush1.bf16.msra.mxu0 0
          %1579 = vmatprep.subr.bf16.mxu0 0
          %1580 = vmatpush1.bf16.msra.mxu0 0
          %1581 = vmatprep.subr.bf16.mxu0 0
          %1582 = vmatpush1.bf16.msra.mxu0 0
          %1583 = vmatprep.subr.bf16.mxu0 0
          %1584 = vmatpush1.bf16.msra.mxu0 0
          %1585 = vmatprep.subr.bf16.mxu0 0
          %1586 = vmatpush1.bf16.msra.mxu0 0
          %1587 = vmatprep.mubr.bf16.mxu0 0
          %1588 = vmatmul.mubr.bf16.gmra.mrb[0].mxu0 %v1553
          %v1589 = vpop.f32.mrb[0].mxu0
          %v1590 = vadd.f32 0.0, %v1589
          %v1591 = vpop.f32.mrb[0].mxu0
          %v1592 = vadd.f32 0.0, %v1591
          %v1593 = vpop.f32.mrb[0].mxu0
          %v1594 = vadd.f32 0.0, %v1593
          %v1595 = vpop.f32.mrb[0].mxu0
          %v1596 = vadd.f32 0.0, %v1595
          %1597 = vdwg.mxu0
          %v1598 = vadd.f32 %v1527, %v1590
          %v1599 = vadd.f32 %v1528, %v1592
          %v1600 = vadd.f32 %v1529, %v1594
          %v1601 = vadd.f32 %v1530, %v1596
          %1602 = vst [vmem:[#allocation2] sm:$0xff] %v1598
          %1603 = vst [vmem:[#allocation2 + $0x8] sm:$0xff] %v1599
          %1604 = vst [vmem:[#allocation2 + $0x10] sm:$0xff] %v1600
          %1605 = vst [vmem:[#allocation2 + $0x18] sm:$0xff] %v1601
        $region120: #{_se_forward_impl.1} parent=103 // pred_fallthru
          _
        %p1606 = scmp.eq.s32.totalorder %s30, 5
        // Predicated region
        $region121: #{_se_forward_impl.1} parent=103 // pred_check
          %p1607 = pneg %p1606
        $region122: #{_se_forward_impl.1} parent=103 // pred_check_branch
          %1609 = sbr.rel (%p1607) target = $region124
        $region123: #{_se_forward_impl.1} parent=103 // pred_region
          %v1610 = vld [vmem:[#allocation2] sm:$0xff]
          %v1611 = vld [vmem:[#allocation2 + $0x8] sm:$0xff]
          %v1612 = vld [vmem:[#allocation2 + $0x10] sm:$0xff]
          %v1613 = vld [vmem:[#allocation2 + $0x18] sm:$0xff]
          %v1614 = vld [vmem:[%s4] sm:$0xf]
          %v1615 = vld [vmem:[%s5] sm:$0xf]
          %1617 = vset.pattern.permute.xlu0 0
          %1618 = vperm.xlu0 %1617, %v1615
          %v1619 = vpop.permute.xlu0 %1618
          %vm1621 = vcmask 130048
          %v1623 = vsel %vm1621, %v1614, 0
          %1625 = vmatprep.subr.mxu0 %v1611
          %1626 = vmatpush1.msra.mxu0 %v1610
          %1627 = vmatprep.subr.mxu0 %v1613
          %1628 = vmatpush1.msra.mxu0 %v1612
          %1629 = vmatprep.subr.mxu0 0.0
          %1630 = vmatpush1.msra.mxu0 0.0
          %1631 = vmatprep.subr.mxu0 0.0
          %1632 = vmatpush1.msra.mxu0 0.0
          %1633 = vmatprep.subr.mxu0 0.0
          %1634 = vmatpush1.msra.mxu0 0.0
          %1635 = vmatprep.subr.mxu0 0.0
          %1636 = vmatpush1.msra.mxu0 0.0
          %1637 = vmatprep.subr.mxu0 0.0
          %1638 = vmatpush1.msra.mxu0 0.0
          %1639 = vmatprep.subr.mxu0 0.0
          %1640 = vmatpush1.msra.mxu0 0.0
          %1641 = vmatprep.subr.mxu0 0.0
          %1642 = vmatpush1.msra.mxu0 0.0
          %1643 = vmatprep.subr.mxu0 0.0
          %1644 = vmatpush1.msra.mxu0 0.0
          %1645 = vmatprep.subr.mxu0 0.0
          %1646 = vmatpush1.msra.mxu0 0.0
          %1647 = vmatprep.subr.mxu0 0.0
          %1648 = vmatpush1.msra.mxu0 0.0
          %1649 = vmatprep.subr.mxu0 0.0
          %1650 = vmatpush1.msra.mxu0 0.0
          %1651 = vmatprep.subr.mxu0 0.0
          %1652 = vmatpush1.msra.mxu0 0.0
          %1653 = vmatprep.subr.mxu0 0.0
          %1654 = vmatpush1.msra.mxu0 0.0
          %1655 = vmatprep.subr.mxu0 0.0
          %1656 = vmatpush1.msra.mxu0 0.0
          %1657 = vmatprep.subr.mxu0 0.0
          %1658 = vmatpush1.msra.mxu0 0.0
          %1659 = vmatprep.subr.mxu0 0.0
          %1660 = vmatpush1.msra.mxu0 0.0
          %1661 = vmatprep.subr.mxu0 0.0
          %1662 = vmatpush1.msra.mxu0 0.0
          %1663 = vmatprep.subr.mxu0 0.0
          %1664 = vmatpush1.msra.mxu0 0.0
          %1665 = vmatprep.subr.mxu0 0.0
          %1666 = vmatpush1.msra.mxu0 0.0
          %1667 = vmatprep.subr.mxu0 0.0
          %1668 = vmatpush1.msra.mxu0 0.0
          %1669 = vmatprep.subr.mxu0 0.0
          %1670 = vmatpush1.msra.mxu0 0.0
          %1671 = vmatprep.subr.mxu0 0.0
          %1672 = vmatpush1.msra.mxu0 0.0
          %1673 = vmatprep.subr.mxu0 0.0
          %1674 = vmatpush1.msra.mxu0 0.0
          %1675 = vmatprep.subr.mxu0 0.0
          %1676 = vmatpush1.msra.mxu0 0.0
          %1677 = vmatprep.subr.mxu0 0.0
          %1678 = vmatpush1.msra.mxu0 0.0
          %1679 = vmatprep.subr.mxu0 0.0
          %1680 = vmatpush1.msra.mxu0 0.0
          %1681 = vmatprep.subr.mxu0 0.0
          %1682 = vmatpush1.msra.mxu0 0.0
          %1683 = vmatprep.subr.mxu0 0.0
          %1684 = vmatpush1.msra.mxu0 0.0
          %1685 = vmatprep.subr.mxu0 0.0
          %1686 = vmatpush1.msra.mxu0 0.0
          %1687 = vmatprep.subr.mxu0 0.0
          %1688 = vmatpush1.msra.mxu0 0.0
          %1689 = vmatprep.mubr.f32.mxu0 0.0
          %1690 = vmatmul.mubr.f32.gmra.mrb[0].mxu0 %v1623
          %v1691 = vpop.f32.mrb[0].mxu0
          %v1692 = vadd.f32 %v1619, %v1691
          %v1693 = vpop.f32.mrb[0].mxu0
          %v1694 = vadd.f32 %v1619, %v1693
          %1695 = vdwg.mxu0
          %v1696 = vmax.f32 %v1692, 0.0
          %v1697 = vmax.f32 %v1694, 0.0
          %v1698 = vld [vmem:[%s6] sm:$0xff]
          %v1699 = vld [vmem:[%s6 + $0x8] sm:$0xff]
          %v1700 = vld [vmem:[%s7] sm:$0xff]
          %v1701 = vld [vmem:[%s7 + $0x8] sm:$0xff]
          %1703 = vset.pattern.permute.xlu0 0
          %1704 = vperm.xlu0 %1703, %v1700
          %v1705 = vpop.permute.xlu0 %1704
          %1708 = vset.pattern.permute.xlu0 0
          %1709 = vperm.xlu0 %1708, %v1701
          %v1710 = vpop.permute.xlu0 %1709
          %vm1712 = vcmask 31744
          %v1714 = vsel %vm1712, %v1698, 0
          %v1717 = vsel %vm1712, %v1699, 0
          %vm1719 = vcmask 1043456
          %v1721 = vsel %vm1719, %v1696, 0
          %v1724 = vsel %vm1719, %v1697, 0
          %1726 = vmatprep.subr.mxu0 %v1724
          %1727 = vmatpush1.msra.mxu0 %v1721
          %1728 = vmatprep.subr.mxu0 0.0
          %1729 = vmatpush1.msra.mxu0 0.0
          %1730 = vmatprep.subr.mxu0 0.0
          %1731 = vmatpush1.msra.mxu0 0.0
          %1732 = vmatprep.subr.mxu0 0.0
          %1733 = vmatpush1.msra.mxu0 0.0
          %1734 = vmatprep.subr.mxu0 0.0
          %1735 = vmatpush1.msra.mxu0 0.0
          %1736 = vmatprep.subr.mxu0 0.0
          %1737 = vmatpush1.msra.mxu0 0.0
          %1738 = vmatprep.subr.mxu0 0.0
          %1739 = vmatpush1.msra.mxu0 0.0
          %1740 = vmatprep.subr.mxu0 0.0
          %1741 = vmatpush1.msra.mxu0 0.0
          %1742 = vmatprep.subr.mxu0 0.0
          %1743 = vmatpush1.msra.mxu0 0.0
          %1744 = vmatprep.subr.mxu0 0.0
          %1745 = vmatpush1.msra.mxu0 0.0
          %1746 = vmatprep.subr.mxu0 0.0
          %1747 = vmatpush1.msra.mxu0 0.0
          %1748 = vmatprep.subr.mxu0 0.0
          %1749 = vmatpush1.msra.mxu0 0.0
          %1750 = vmatprep.subr.mxu0 0.0
          %1751 = vmatpush1.msra.mxu0 0.0
          %1752 = vmatprep.subr.mxu0 0.0
          %1753 = vmatpush1.msra.mxu0 0.0
          %1754 = vmatprep.subr.mxu0 0.0
          %1755 = vmatpush1.msra.mxu0 0.0
          %1756 = vmatprep.subr.mxu0 0.0
          %1757 = vmatpush1.msra.mxu0 0.0
          %1758 = vmatprep.subr.mxu0 0.0
          %1759 = vmatpush1.msra.mxu0 0.0
          %1760 = vmatprep.subr.mxu0 0.0
          %1761 = vmatpush1.msra.mxu0 0.0
          %1762 = vmatprep.subr.mxu0 0.0
          %1763 = vmatpush1.msra.mxu0 0.0
          %1764 = vmatprep.subr.mxu0 0.0
          %1765 = vmatpush1.msra.mxu0 0.0
          %1766 = vmatprep.subr.mxu0 0.0
          %1767 = vmatpush1.msra.mxu0 0.0
          %1768 = vmatprep.subr.mxu0 0.0
          %1769 = vmatpush1.msra.mxu0 0.0
          %1770 = vmatprep.subr.mxu0 0.0
          %1771 = vmatpush1.msra.mxu0 0.0
          %1772 = vmatprep.subr.mxu0 0.0
          %1773 = vmatpush1.msra.mxu0 0.0
          %1774 = vmatprep.subr.mxu0 0.0
          %1775 = vmatpush1.msra.mxu0 0.0
          %1776 = vmatprep.subr.mxu0 0.0
          %1777 = vmatpush1.msra.mxu0 0.0
          %1778 = vmatprep.subr.mxu0 0.0
          %1779 = vmatpush1.msra.mxu0 0.0
          %1780 = vmatprep.subr.mxu0 0.0
          %1781 = vmatpush1.msra.mxu0 0.0
          %1782 = vmatprep.subr.mxu0 0.0
          %1783 = vmatpush1.msra.mxu0 0.0
          %1784 = vmatprep.subr.mxu0 0.0
          %1785 = vmatpush1.msra.mxu0 0.0
          %1786 = vmatprep.subr.mxu0 0.0
          %1787 = vmatpush1.msra.mxu0 0.0
          %1788 = vmatprep.subr.mxu0 0.0
          %1789 = vmatpush1.msra.mxu0 0.0
          %1790 = vmatprep.mubr.f32.mxu0 0.0
          %1791 = vmatmul.mubr.f32.gmra.mrb[0].mxu0 %v1714
          %v1792 = vpop.f32.mrb[0].mxu0
          %v1793 = vadd.f32 %v1705, %v1792
          %v1794 = vpop.f32.mrb[0].mxu0
          %v1795 = vadd.f32 %v1705, %v1794
          %1796 = vmatprep.mubr.f32.mxu0 0.0
          %1797 = vmatmul.mubr.f32.gmra.mrb[0].mxu0 %v1717
          %v1798 = vpop.f32.mrb[0].mxu0
          %v1799 = vadd.f32 %v1710, %v1798
          %v1800 = vpop.f32.mrb[0].mxu0
          %v1801 = vadd.f32 %v1710, %v1800
          %1802 = vdwg.mxu0
          %v1803 = vxor.u32 %v1793, 2147483648
          %v1804 = vxor.u32 %v1795, 2147483648
          %v1805 = vxor.u32 %v1799, 2147483648
          %v1806 = vxor.u32 %v1801, 2147483648
          %v1807 = vmul.f32 %v1803, 1.442695
          %v1808 = vpow.pop %v1807
          %v1809 = vmul.f32 %v1804, 1.442695
          %v1810 = vpow.pop %v1809
          %v1811 = vmul.f32 %v1805, 1.442695
          %v1812 = vpow.pop %v1811
          %v1813 = vmul.f32 %v1806, 1.442695
          %v1814 = vpow.pop %v1813
          %v1815 = vadd.f32 %v1808, 1.0
          %v1816 = vadd.f32 %v1810, 1.0
          %v1817 = vadd.f32 %v1812, 1.0
          %v1818 = vadd.f32 %v1814, 1.0
          %v1819 = vrcp.pop %v1815
          %v1820 = vmul.f32 1.0, %v1819
          %v1821 = vrcp.pop %v1816
          %v1822 = vmul.f32 1.0, %v1821
          %v1823 = vrcp.pop %v1817
          %v1824 = vmul.f32 1.0, %v1823
          %v1825 = vrcp.pop %v1818
          %v1826 = vmul.f32 1.0, %v1825
          %v1827 = vld [vmem:[%s368] sm:$0xff]
          %v1828 = vld [vmem:[%s368 + $0x8] sm:$0xff]
          %v1829 = vld [vmem:[%s368 + $0x10] sm:$0xff]
          %v1830 = vld [vmem:[%s368 + $0x18] sm:$0xff]
          %v1831 = vmul.f32 %v1827, %v1820
          %v1832 = vmul.f32 %v1828, %v1822
          %v1833 = vmul.f32 %v1829, %v1824
          %v1834 = vmul.f32 %v1830, %v1826
          %1835 = vst [vmem:[%s404] sm:$0xff] %v1831
          %1836 = vst [vmem:[%s404 + $0x8] sm:$0xff] %v1832
          %1837 = vst [vmem:[%s404 + $0x10] sm:$0xff] %v1833
          %1838 = vst [vmem:[%s404 + $0x18] sm:$0xff] %v1834
        $region124: #{_se_forward_impl.1} parent=103 // pred_fallthru
          _
        %s1839 = sand.u32 %s211, 1
        %s1840 = sand.u32 %s211, 1
        %s1841 = smul.addr %s1840, 32
        %s1842 = scalar_lea.vmem [#allocation7], %s1841
        // Predicated region
        $region125: #{_se_forward_impl.1} parent=103 // pred_check
          %p1843 = pneg %p221
        $region126: #{_se_forward_impl.1} parent=103 // pred_check_branch
          %1845 = sbr.rel (%p1843) target = $region128
        $region127: #{_se_forward_impl.1} parent=103 // pred_region
          %s1846 = smul.u32 2, %s29
          %s1847 = smul.addr %s1846, 8
          %s1848 = scalar_lea.vmem %s8, %s1847
          // Predicated region
          $region129: #{_se_forward_impl.1} parent=127 // pred_check
            _
          $region130: #{_se_forward_impl.1} parent=127 // pred_check_branch
            %1850 = sbr.rel (0) target = $region132
          $region131: #{_se_forward_impl.1} parent=127 // pred_region
            // Predicated region
            $region133: #{_se_forward_impl.1} parent=131 // pred_check
              _
            $region134: #{_se_forward_impl.1} parent=131 // pred_check_branch
              %1852 = sbr.rel (0) target = $region136
            $region135: #{_se_forward_impl.1} parent=131 // pred_region
              loop: start=0, step=1, limit=1
              $region137: #{_se_forward_impl.1} parent=135 // loop_pre_header
                _
              $region138: #{_se_forward_impl.1} parent=135 // loop_header
                %s1854 = sphi 0, %s1858
                %p1855 = scmp.ge.s32.totalorder %s1854, 1
                %s1859 = sphi %s1842, %s1842
                %s1860 = sphi %s1848, %s1848
              $region139: #{_se_forward_impl.1} parent=135 // loop_header_branch
                %1857 = sbr.rel (%p1855) target = $region143
              $region140: #{_se_forward_impl.1} parent=135 // loop_body
                %v1861 = vld [vmem:[%s1859] sm:$0xff]
                %1862 = vst [vmem:[%s1860] sm:$0xff] %v1861
                %v1863 = vld [vmem:[%s1859 + $0x8] sm:$0xff]
                %1864 = vst [vmem:[%s1860 + $0x8] sm:$0xff] %v1863
                %v1865 = vld [vmem:[%s1859 + $0x10] sm:$0xff]
                %1866 = vst [vmem:[%s1860 + $0x40] sm:$0xff] %v1865
                %v1867 = vld [vmem:[%s1859 + $0x18] sm:$0xff]
                %1868 = vst [vmem:[%s1860 + $0x48] sm:$0xff] %v1867
              $region141: #{_se_forward_impl.1} parent=135 // loop_footer
                %s1858 = sadd.s32 1, %s1854
              $region142: #{_se_forward_impl.1} parent=135 // loop_footer_branch
                %1853 = sbr.rel target = $region138
              $region143: #{_se_forward_impl.1} parent=135 // loop_exit
                _
            $region136: #{_se_forward_impl.1} parent=131 // pred_fallthru
              _
            // Predicated region
            $region144: #{_se_forward_impl.1} parent=131 // pred_check
              _
            $region145: #{_se_forward_impl.1} parent=131 // pred_check_branch
              %1870 = sbr.rel target = $region147
            $region146: #{_se_forward_impl.1} parent=131 // pred_region
              _
            $region147: #{_se_forward_impl.1} parent=131 // pred_fallthru
              _
          $region132: #{_se_forward_impl.1} parent=127 // pred_fallthru
            _
          %1871 = vnop
        $region128: #{_se_forward_impl.1} parent=103 // pred_fallthru
          _
      $region104: #{_se_forward_impl.1} parent=5 // pred_fallthru
        _
      %p1872 = scmp.le.s32.totalorder 2, %s20
      // Predicated region
      $region148: #{_se_forward_impl.1} parent=5 // pred_check
        %p1873 = pneg %p1872
      $region149: #{_se_forward_impl.1} parent=5 // pred_check_branch
        %1875 = sbr.rel (%p1873) target = $region151
      $region150: #{_se_forward_impl.1} parent=5 // pred_region
        %s1876 = ssub.s32 %s20, 2
        // Predicated region
        $region152: #{_se_forward_impl.1} parent=150 // pred_check
          %p1877 = pneg %p227
        $region153: #{_se_forward_impl.1} parent=150 // pred_check_branch
          %1879 = sbr.rel (%p1877) target = $region155
        $region154: #{_se_forward_impl.1} parent=150 // pred_region
          %s1880 = sand.u32 %s212, 1
          %s1881 = sand.u32 %s212, 1
          %s1882 = smul.addr %s1881, 32
          %s1883 = scalar_lea.vmem [#allocation7], %s1882
        $region155: #{_se_forward_impl.1} parent=150 // pred_fallthru
          _
      $region151: #{_se_forward_impl.1} parent=5 // pred_fallthru
        _
    $region6: #{_se_forward_impl.1} parent=1 // loop_footer
      %s24 = sadd.s32 1, %s20
    $region7: #{_se_forward_impl.1} parent=1 // loop_footer_branch
      %19 = sbr.rel target = $region3
    $region8: #{_se_forward_impl.1} parent=1 // loop_exit
      _

</llo_original>
